<compile_context>
chip_gen: v7x
topology: tpu7x:2x2x1
jax: 0.10.0
libtpu: 0.0.40
codegen_flags: <defaults>
</compile_context>

<pallas_src>
import jax
import jax.numpy as jnp
from jax.experimental import pallas as pl
from jax.experimental.pallas import tpu as pltpu

B_TILE = 128  # batch rows per grid program, on the 128-lane axis


def agent_two_kernel(tok_ref, git_ref, whht_ref, bhhn_ref, wh1t_ref, bh1_ref,
                     logits_ref):
    """One batch tile (batch-in-lanes) per program.

    tok_ref   : i32 [T, Bt]      tokens, time-major, batch on lanes
    git_ref   : f32 [3H, Vpad]   (emb @ W_ih + b_ih + [b_hh_rz, 0])^T, zero-padded cols
    whht_ref  : f32 [3H, E]      W_hh^T, gate-major rows (r | z | n)
    bhhn_ref  : f32 [H, 1]       n-gate half of b_hh (must stay inside: multiplied by r)
    wh1t_ref  : f32 [A, E]       h1 weight, transposed
    bh1_ref   : f32 [A, 1]       h1 bias
    logits_ref: f32 [A, Bt]      action logits, transposed (lane-dense store)
    """
    T, Bt = tok_ref.shape
    G, Vpad = git_ref.shape
    H = G // 3

    tok = tok_ref[...]                                   # i32 [T, Bt]
    git = git_ref[...]                                   # f32 [3H, Vpad]
    whht = whht_ref[...]                                 # f32 [3H, E]
    bhhn = jnp.broadcast_to(bhhn_ref[...], (H, Bt))      # hoisted broadcast
    vocab_iota = jax.lax.broadcasted_iota(jnp.int32, (Vpad, Bt), 0)

    # AliveSieve masks are token-only: hoist them out of the recurrence carry.
    # alive[t-1] == True  <=>  no zero token among steps 0..t-1 (row still live
    # entering step t).  Step 0 is always applied, so it needs no mask.
    alive = []
    live = tok[0:1, :] != 0
    for t in range(1, T):
        alive.append(live)
        live = jnp.logical_and(live, tok[t:t + 1, :] != 0)

    def gi_at(t):
        # Fused embedding + input projection + bias lookup via a tiny one-hot
        # matmul.  Depends only on tokens, so even though it is emitted inside
        # the unrolled step it is NOT on the serial state-dependency path.
        onehot = (vocab_iota == tok[t:t + 1, :]).astype(jnp.float32)       # [Vpad, Bt]
        return jnp.dot(git, onehot, preferred_element_type=jnp.float32)    # [3H, Bt]

    # ---- t = 0: previous state is identically zero -> skip the recurrent matmul.
    g = gi_at(0)
    rz = jax.nn.sigmoid(g[0:2 * H, :])                   # shared sigmoid over (r | z)
    r = rz[0:H, :]
    z = rz[H:2 * H, :]
    n = jnp.tanh(g[2 * H:, :] + r * bhhn)
    state = (1.0 - z) * n                                # + z * state0 (== 0)

    # ---- t = 1 .. T-1: exactly one fused [3H,E] x [E,Bt] MXU push per serial step.
    for t in range(1, T):
        gh = jnp.dot(whht, state, preferred_element_type=jnp.float32)      # [3H, Bt]
        g = gi_at(t)
        rz = jax.nn.sigmoid(g[0:2 * H, :] + gh[0:2 * H, :])                # sublane-split gates
        r = rz[0:H, :]
        z = rz[H:2 * H, :]
        n = jnp.tanh(g[2 * H:, :] + r * (gh[2 * H:, :] + bhhn))
        new_state = (1.0 - z) * n + z * state
        # AliveSieve semantics: rows already dead keep their frozen state.
        state = jnp.where(alive[t - 1], new_state, state)

    # h1 linear -> logits^T (lane-dense store).  Softmax / sampling in wrapper.
    logits_ref[...] = (
        jnp.dot(wh1t_ref[...], state, preferred_element_type=jnp.float32)
        + bh1_ref[...])


def agent_two_forward(utterance, params, *, sample_key):
    """utterance: int32 [B, T]. Returns (action_probs [B, A], actions [B])."""
    B, T = utterance.shape
    E = params["emb"].shape[1]
    H = E
    A = params["w_h1"].shape[1]
    Vp1 = params["emb"].shape[0]

    # ---- One-time wrapper-side weight prep (all tiny; off the hot path) ----
    # Fold embedding into the input projection, plus b_ih and the r/z halves of
    # b_hh (purely additive pre-sigmoid).  The n-gate half of b_hh stays out
    # because it is multiplied by r inside the cell.
    gi_table = params["emb"] @ params["w_ih"] + params["b_ih"]          # [V+1, 3H]
    gi_table = gi_table.at[:, :2 * H].add(params["b_hh"][:, :2 * H])
    Vpad = ((Vp1 + 7) // 8) * 8   # pad the contraction dim to a sublane multiple
    git = jnp.zeros((3 * H, Vpad), jnp.float32).at[:, :Vp1].set(gi_table.T)
    whht = params["w_hh"].T.astype(jnp.float32)                          # [3H, E]
    bhhn = params["b_hh"][:, 2 * H:].T.astype(jnp.float32)               # [H, 1]
    wh1t = params["w_h1"].T.astype(jnp.float32)                          # [A, E]
    bh1 = params["b_h1"].T.astype(jnp.float32)                           # [A, 1]

    # ---- Batch padding + time-major, batch-in-lanes token layout -----------
    pad = (-B) % B_TILE
    if pad:
        # Padded rows carry token 0: they die at t=0 with zero state; their
        # logits are just b_h1 and are sliced off below.
        utterance = jnp.concatenate(
            [utterance, jnp.zeros((pad, T), utterance.dtype)], axis=0)
    Bp = B + pad
    tok_tm = utterance.T.astype(jnp.int32)                               # [T, Bp]

    grid = (Bp // B_TILE,)
    rep = lambda shape: pl.BlockSpec(shape, lambda i: (0, 0))            # replicated weights

    logits_t = pl.pallas_call(
        agent_two_kernel,
        out_shape=jax.ShapeDtypeStruct((A, Bp), jnp.float32),
        grid=grid,
        in_specs=[
            pl.BlockSpec((T, B_TILE), lambda i: (0, i)),   # tokens (only T*4 B per row)
            rep((3 * H, Vpad)),                            # fused gi table
            rep((3 * H, E)),                               # W_hh^T, gate-major
            rep((H, 1)),                                   # b_hh (n gate)
            rep((A, E)),                                   # W_h1^T
            rep((A, 1)),                                   # b_h1
        ],
        out_specs=pl.BlockSpec((A, B_TILE), lambda i: (0, i)),
        compiler_params=pltpu.CompilerParams(
            dimension_semantics=("parallel",)),
    )(tok_tm, git, whht, bhhn, wh1t, bh1)

    logits = logits_t.T[:B]                                              # [B, A]
    action_probs = jax.nn.softmax(logits, axis=-1)
    # rl_common.draw_categorical_sample: multinomial draw from action_probs.
    actions = jax.random.categorical(sample_key, logits, axis=-1)
    return action_probs, actions


def reference_forward(utterance, params):
    """Pure-JAX reference of the PyTorch loop (for correctness check)."""
    B, T = utterance.shape
    E = params["emb"].shape[1]
    H = E
    state = jnp.zeros((B, E), jnp.float32)
    dead = jnp.zeros((B,), bool)
    for t in range(T):
        tok = utterance[:, t]
        emb = params["emb"][tok]
        gi = emb @ params["w_ih"] + params["b_ih"][0]
        gh = state @ params["w_hh"] + params["b_hh"][0]
        r = jax.nn.sigmoid(gi[:, 0:H] + gh[:, 0:H])
        z = jax.nn.sigmoid(gi[:, H:2 * H] + gh[:, H:2 * H])
        n = jnp.tanh(gi[:, 2 * H:3 * H] + r * gh[:, 2 * H:3 * H])
        new_state = (1.0 - z) * n + z * state
        state = jnp.where(dead[:, None], state, new_state)
        dead = dead | (tok == 0)
    logits = state @ params["w_h1"] + params["b_h1"][0]
    return jax.nn.softmax(logits, axis=-1)


def init_params(key, vocab_size, embedding_size, num_actions):
    E, A = embedding_size, num_actions
    k = jax.random.split(key, 7)
    s = 1.0 / jnp.sqrt(E)
    return {
        "emb":  jax.random.normal(k[0], (vocab_size + 1, E), jnp.float32),
        "w_ih": jax.random.uniform(k[1], (E, 3 * E), jnp.float32, -s, s),
        "w_hh": jax.random.uniform(k[2], (E, 3 * E), jnp.float32, -s, s),
        "b_ih": jax.random.uniform(k[3], (1, 3 * E), jnp.float32, -s, s),
        "b_hh": jax.random.uniform(k[4], (1, 3 * E), jnp.float32, -s, s),
        "w_h1": jax.random.uniform(k[5], (E, A), jnp.float32, -s, s),
        "b_h1": jax.random.uniform(k[6], (1, A), jnp.float32, -s, s),
    }


if __name__ == "__main__":
    # B=200 pads to 256 -> two 128-row lane-dense tiles (exercises padding and
    # the parallel grid) while the total problem stays tiny.
    B, T = 200, 6
    vocab_size, embedding_size, num_actions = 10, 32, 4

    root = jax.random.PRNGKey(0)
    k_params, k_utt, k_sample = jax.random.split(root, 3)

    params = init_params(k_params, vocab_size, embedding_size, num_actions)
    # tokens in [0, vocab_size]; 0 is the terminator handled by the sieve
    utterance = jax.random.randint(k_utt, (B, T), 0, vocab_size + 1, jnp.int32)
    global_idxes = jnp.arange(B, dtype=jnp.int32)  # passed through to the sampler

    probs, actions = agent_two_forward(utterance, params, sample_key=k_sample)
    probs = jax.block_until_ready(probs)
    actions = jax.block_until_ready(actions)

    ref = reference_forward(utterance, params)
    assert probs.shape == (B, num_actions)
    assert actions.shape == (B,)
    assert jnp.allclose(probs, ref, atol=1e-5, rtol=1e-5), "mismatch vs reference"

    # TODO(synk): rl_common.draw_categorical_sample returns a Sample object
    # (actions / log-probs / entropy bookkeeping keyed by global_idxes); only
    # the action draw is reproduced here, in the wrapper.
    print("KERNEL_OK")
</pallas_src>

<mosaic_0001>
module attributes {stable_mosaic.version = 11 : i64} {
  func.func @agent_two_kernel(%arg0: i32, %arg1: memref<6x128xi32, #tpu.memory_space<vmem>>, %arg2: memref<96x16xf32, #tpu.memory_space<vmem>>, %arg3: memref<96x32xf32, #tpu.memory_space<vmem>>, %arg4: memref<32x1xf32, #tpu.memory_space<vmem>>, %arg5: memref<4x32xf32, #tpu.memory_space<vmem>>, %arg6: memref<4x1xf32, #tpu.memory_space<vmem>>, %arg7: memref<4x128xf32, #tpu.memory_space<vmem>>) attributes {dimension_semantics = [#tpu.dimension_semantics<parallel>], iteration_bounds = array<i64: 2>, scalar_prefetch = 0 : i64, scratch_operands = 0 : i64, tpu.core_type = #tpu.core_type<tc>, window_params = [{transform_indices = @transform_0, window_bounds = array<i64: 6, 128>}, {pipeline_mode = #tpu.pipeline_mode<synchronous>, transform_indices = @transform_1, window_bounds = array<i64: 96, 16>}, {pipeline_mode = #tpu.pipeline_mode<synchronous>, transform_indices = @transform_2, window_bounds = array<i64: 96, 32>}, {pipeline_mode = #tpu.pipeline_mode<synchronous>, transform_indices = @transform_3, window_bounds = array<i64: 32, 1>}, {pipeline_mode = #tpu.pipeline_mode<synchronous>, transform_indices = @transform_4, window_bounds = array<i64: 4, 32>}, {pipeline_mode = #tpu.pipeline_mode<synchronous>, transform_indices = @transform_5, window_bounds = array<i64: 4, 1>}, {transform_indices = @transform_6, window_bounds = array<i64: 4, 128>}]} {
    %c0 = arith.constant 0 : index
    %c0_0 = arith.constant 0 : index
    %0 = vector.load %arg1[%c0, %c0_0] : memref<6x128xi32, #tpu.memory_space<vmem>>, vector<6x128xi32>
    %c0_1 = arith.constant 0 : index
    %c0_2 = arith.constant 0 : index
    %1 = vector.load %arg2[%c0_1, %c0_2] : memref<96x16xf32, #tpu.memory_space<vmem>>, vector<96x16xf32>
    %c0_3 = arith.constant 0 : index
    %c0_4 = arith.constant 0 : index
    %2 = vector.load %arg3[%c0_3, %c0_4] : memref<96x32xf32, #tpu.memory_space<vmem>>, vector<96x32xf32>
    %c0_5 = arith.constant 0 : index
    %c0_6 = arith.constant 0 : index
    %3 = vector.load %arg4[%c0_5, %c0_6] : memref<32x1xf32, #tpu.memory_space<vmem>>, vector<32x1xf32>
    %4 = vector.shape_cast %3 : vector<32x1xf32> to vector<32x1xf32>
    %5 = vector.broadcast %4 : vector<32x1xf32> to vector<32x128xf32>
    %6 = tpu.iota {dimensions = array<i32: 0>} : vector<16x128xi32>
    %7 = vector.extract_strided_slice %0 {offsets = [0, 0], sizes = [1, 128], strides = [1, 1]} : vector<6x128xi32> to vector<1x128xi32>
    %c0_i32 = arith.constant 0 : i32
    %8 = vector.broadcast %c0_i32 : i32 to vector<1x128xi32>
    %9 = arith.cmpi ne, %7, %8 : vector<1x128xi32>
    %10 = vector.extract_strided_slice %0 {offsets = [1, 0], sizes = [1, 128], strides = [1, 1]} : vector<6x128xi32> to vector<1x128xi32>
    %c0_i32_7 = arith.constant 0 : i32
    %11 = vector.broadcast %c0_i32_7 : i32 to vector<1x128xi32>
    %12 = arith.cmpi ne, %10, %11 : vector<1x128xi32>
    %13 = arith.andi %9, %12 : vector<1x128xi1>
    %14 = vector.extract_strided_slice %0 {offsets = [2, 0], sizes = [1, 128], strides = [1, 1]} : vector<6x128xi32> to vector<1x128xi32>
    %c0_i32_8 = arith.constant 0 : i32
    %15 = vector.broadcast %c0_i32_8 : i32 to vector<1x128xi32>
    %16 = arith.cmpi ne, %14, %15 : vector<1x128xi32>
    %17 = arith.andi %13, %16 : vector<1x128xi1>
    %18 = vector.extract_strided_slice %0 {offsets = [3, 0], sizes = [1, 128], strides = [1, 1]} : vector<6x128xi32> to vector<1x128xi32>
    %c0_i32_9 = arith.constant 0 : i32
    %19 = vector.broadcast %c0_i32_9 : i32 to vector<1x128xi32>
    %20 = arith.cmpi ne, %18, %19 : vector<1x128xi32>
    %21 = arith.andi %17, %20 : vector<1x128xi1>
    %22 = vector.extract_strided_slice %0 {offsets = [4, 0], sizes = [1, 128], strides = [1, 1]} : vector<6x128xi32> to vector<1x128xi32>
    %c0_i32_10 = arith.constant 0 : i32
    %23 = vector.broadcast %c0_i32_10 : i32 to vector<1x128xi32>
    %24 = arith.cmpi ne, %22, %23 : vector<1x128xi32>
    %25 = arith.andi %21, %24 : vector<1x128xi1>
    %26 = vector.extract_strided_slice %0 {offsets = [0, 0], sizes = [1, 128], strides = [1, 1]} : vector<6x128xi32> to vector<1x128xi32>
    %27 = vector.broadcast %26 : vector<1x128xi32> to vector<16x128xi32>
    %28 = arith.cmpi eq, %6, %27 : vector<16x128xi32>
    %29 = arith.extui %28 : vector<16x128xi1> to vector<16x128xi32>
    %30 = arith.sitofp %29 : vector<16x128xi32> to vector<16x128xf32>
    %cst = arith.constant dense<0.000000e+00> : vector<96x128xf32>
    %31 = tpu.matmul %1, %30, %cst {dimension_numbers = #tpu.dot_dimension_numbers<[1], [0], [0], [1], [0, 0, 1, 1], [], []>} : vector<96x16xf32>, vector<16x128xf32>, vector<96x128xf32> -> vector<96x128xf32>
    %32 = vector.extract_strided_slice %31 {offsets = [0, 0], sizes = [64, 128], strides = [1, 1]} : vector<96x128xf32> to vector<64x128xf32>
    %33 = arith.negf %32 : vector<64x128xf32>
    %34 = math.exp %33 : vector<64x128xf32>
    %cst_11 = arith.constant 1.000000e+00 : f32
    %35 = vector.broadcast %cst_11 : f32 to vector<64x128xf32>
    %36 = arith.addf %35, %34 : vector<64x128xf32>
    %37 = arith.divf %35, %36 : vector<64x128xf32>
    %38 = vector.extract_strided_slice %37 {offsets = [0, 0], sizes = [32, 128], strides = [1, 1]} : vector<64x128xf32> to vector<32x128xf32>
    %39 = vector.extract_strided_slice %37 {offsets = [32, 0], sizes = [32, 128], strides = [1, 1]} : vector<64x128xf32> to vector<32x128xf32>
    %40 = vector.extract_strided_slice %31 {offsets = [64, 0], sizes = [32, 128], strides = [1, 1]} : vector<96x128xf32> to vector<32x128xf32>
    %41 = arith.mulf %38, %5 : vector<32x128xf32>
    %42 = arith.addf %40, %41 : vector<32x128xf32>
    %43 = math.tanh %42 : vector<32x128xf32>
    %cst_12 = arith.constant 1.000000e+00 : f32
    %44 = vector.broadcast %cst_12 : f32 to vector<32x128xf32>
    %45 = arith.subf %44, %39 : vector<32x128xf32>
    %46 = arith.mulf %45, %43 : vector<32x128xf32>
    %cst_13 = arith.constant dense<0.000000e+00> : vector<96x128xf32>
    %47 = tpu.matmul %2, %46, %cst_13 {dimension_numbers = #tpu.dot_dimension_numbers<[1], [0], [0], [1], [0, 0, 1, 1], [], []>} : vector<96x32xf32>, vector<32x128xf32>, vector<96x128xf32> -> vector<96x128xf32>
    %48 = vector.extract_strided_slice %0 {offsets = [1, 0], sizes = [1, 128], strides = [1, 1]} : vector<6x128xi32> to vector<1x128xi32>
    %49 = vector.broadcast %48 : vector<1x128xi32> to vector<16x128xi32>
    %50 = arith.cmpi eq, %6, %49 : vector<16x128xi32>
    %51 = arith.extui %50 : vector<16x128xi1> to vector<16x128xi32>
    %52 = arith.sitofp %51 : vector<16x128xi32> to vector<16x128xf32>
    %cst_14 = arith.constant dense<0.000000e+00> : vector<96x128xf32>
    %53 = tpu.matmul %1, %52, %cst_14 {dimension_numbers = #tpu.dot_dimension_numbers<[1], [0], [0], [1], [0, 0, 1, 1], [], []>} : vector<96x16xf32>, vector<16x128xf32>, vector<96x128xf32> -> vector<96x128xf32>
    %54 = vector.extract_strided_slice %53 {offsets = [0, 0], sizes = [64, 128], strides = [1, 1]} : vector<96x128xf32> to vector<64x128xf32>
    %55 = vector.extract_strided_slice %47 {offsets = [0, 0], sizes = [64, 128], strides = [1, 1]} : vector<96x128xf32> to vector<64x128xf32>
    %56 = arith.addf %54, %55 : vector<64x128xf32>
    %57 = arith.negf %56 : vector<64x128xf32>
    %58 = math.exp %57 : vector<64x128xf32>
    %cst_15 = arith.constant 1.000000e+00 : f32
    %59 = vector.broadcast %cst_15 : f32 to vector<64x128xf32>
    %60 = arith.addf %59, %58 : vector<64x128xf32>
    %61 = arith.divf %59, %60 : vector<64x128xf32>
    %62 = vector.extract_strided_slice %61 {offsets = [0, 0], sizes = [32, 128], strides = [1, 1]} : vector<64x128xf32> to vector<32x128xf32>
    %63 = vector.extract_strided_slice %61 {offsets = [32, 0], sizes = [32, 128], strides = [1, 1]} : vector<64x128xf32> to vector<32x128xf32>
    %64 = vector.extract_strided_slice %53 {offsets = [64, 0], sizes = [32, 128], strides = [1, 1]} : vector<96x128xf32> to vector<32x128xf32>
    %65 = vector.extract_strided_slice %47 {offsets = [64, 0], sizes = [32, 128], strides = [1, 1]} : vector<96x128xf32> to vector<32x128xf32>
    %66 = arith.addf %65, %5 : vector<32x128xf32>
    %67 = arith.mulf %62, %66 : vector<32x128xf32>
    %68 = arith.addf %64, %67 : vector<32x128xf32>
    %69 = math.tanh %68 : vector<32x128xf32>
    %cst_16 = arith.constant 1.000000e+00 : f32
    %70 = vector.broadcast %cst_16 : f32 to vector<32x128xf32>
    %71 = arith.subf %70, %63 : vector<32x128xf32>
    %72 = arith.mulf %71, %69 : vector<32x128xf32>
    %73 = arith.mulf %63, %46 : vector<32x128xf32>
    %74 = arith.addf %72, %73 : vector<32x128xf32>
    %75 = vector.shape_cast %9 : vector<1x128xi1> to vector<1x128xi1>
    %76 = vector.broadcast %75 : vector<1x128xi1> to vector<32x128xi1>
    %77 = arith.select %76, %74, %46 : vector<32x128xi1>, vector<32x128xf32>
    %cst_17 = arith.constant dense<0.000000e+00> : vector<96x128xf32>
    %78 = tpu.matmul %2, %77, %cst_17 {dimension_numbers = #tpu.dot_dimension_numbers<[1], [0], [0], [1], [0, 0, 1, 1], [], []>} : vector<96x32xf32>, vector<32x128xf32>, vector<96x128xf32> -> vector<96x128xf32>
    %79 = vector.extract_strided_slice %0 {offsets = [2, 0], sizes = [1, 128], strides = [1, 1]} : vector<6x128xi32> to vector<1x128xi32>
    %80 = vector.broadcast %79 : vector<1x128xi32> to vector<16x128xi32>
    %81 = arith.cmpi eq, %6, %80 : vector<16x128xi32>
    %82 = arith.extui %81 : vector<16x128xi1> to vector<16x128xi32>
    %83 = arith.sitofp %82 : vector<16x128xi32> to vector<16x128xf32>
    %cst_18 = arith.constant dense<0.000000e+00> : vector<96x128xf32>
    %84 = tpu.matmul %1, %83, %cst_18 {dimension_numbers = #tpu.dot_dimension_numbers<[1], [0], [0], [1], [0, 0, 1, 1], [], []>} : vector<96x16xf32>, vector<16x128xf32>, vector<96x128xf32> -> vector<96x128xf32>
    %85 = vector.extract_strided_slice %84 {offsets = [0, 0], sizes = [64, 128], strides = [1, 1]} : vector<96x128xf32> to vector<64x128xf32>
    %86 = vector.extract_strided_slice %78 {offsets = [0, 0], sizes = [64, 128], strides = [1, 1]} : vector<96x128xf32> to vector<64x128xf32>
    %87 = arith.addf %85, %86 : vector<64x128xf32>
    %88 = arith.negf %87 : vector<64x128xf32>
    %89 = math.exp %88 : vector<64x128xf32>
    %cst_19 = arith.constant 1.000000e+00 : f32
    %90 = vector.broadcast %cst_19 : f32 to vector<64x128xf32>
    %91 = arith.addf %90, %89 : vector<64x128xf32>
    %92 = arith.divf %90, %91 : vector<64x128xf32>
    %93 = vector.extract_strided_slice %92 {offsets = [0, 0], sizes = [32, 128], strides = [1, 1]} : vector<64x128xf32> to vector<32x128xf32>
    %94 = vector.extract_strided_slice %92 {offsets = [32, 0], sizes = [32, 128], strides = [1, 1]} : vector<64x128xf32> to vector<32x128xf32>
    %95 = vector.extract_strided_slice %84 {offsets = [64, 0], sizes = [32, 128], strides = [1, 1]} : vector<96x128xf32> to vector<32x128xf32>
    %96 = vector.extract_strided_slice %78 {offsets = [64, 0], sizes = [32, 128], strides = [1, 1]} : vector<96x128xf32> to vector<32x128xf32>
    %97 = arith.addf %96, %5 : vector<32x128xf32>
    %98 = arith.mulf %93, %97 : vector<32x128xf32>
    %99 = arith.addf %95, %98 : vector<32x128xf32>
    %100 = math.tanh %99 : vector<32x128xf32>
    %cst_20 = arith.constant 1.000000e+00 : f32
    %101 = vector.broadcast %cst_20 : f32 to vector<32x128xf32>
    %102 = arith.subf %101, %94 : vector<32x128xf32>
    %103 = arith.mulf %102, %100 : vector<32x128xf32>
    %104 = arith.mulf %94, %77 : vector<32x128xf32>
    %105 = arith.addf %103, %104 : vector<32x128xf32>
    %106 = vector.shape_cast %13 : vector<1x128xi1> to vector<1x128xi1>
    %107 = vector.broadcast %106 : vector<1x128xi1> to vector<32x128xi1>
    %108 = arith.select %107, %105, %77 : vector<32x128xi1>, vector<32x128xf32>
    %cst_21 = arith.constant dense<0.000000e+00> : vector<96x128xf32>
    %109 = tpu.matmul %2, %108, %cst_21 {dimension_numbers = #tpu.dot_dimension_numbers<[1], [0], [0], [1], [0, 0, 1, 1], [], []>} : vector<96x32xf32>, vector<32x128xf32>, vector<96x128xf32> -> vector<96x128xf32>
    %110 = vector.extract_strided_slice %0 {offsets = [3, 0], sizes = [1, 128], strides = [1, 1]} : vector<6x128xi32> to vector<1x128xi32>
    %111 = vector.broadcast %110 : vector<1x128xi32> to vector<16x128xi32>
    %112 = arith.cmpi eq, %6, %111 : vector<16x128xi32>
    %113 = arith.extui %112 : vector<16x128xi1> to vector<16x128xi32>
    %114 = arith.sitofp %113 : vector<16x128xi32> to vector<16x128xf32>
    %cst_22 = arith.constant dense<0.000000e+00> : vector<96x128xf32>
    %115 = tpu.matmul %1, %114, %cst_22 {dimension_numbers = #tpu.dot_dimension_numbers<[1], [0], [0], [1], [0, 0, 1, 1], [], []>} : vector<96x16xf32>, vector<16x128xf32>, vector<96x128xf32> -> vector<96x128xf32>
    %116 = vector.extract_strided_slice %115 {offsets = [0, 0], sizes = [64, 128], strides = [1, 1]} : vector<96x128xf32> to vector<64x128xf32>
    %117 = vector.extract_strided_slice %109 {offsets = [0, 0], sizes = [64, 128], strides = [1, 1]} : vector<96x128xf32> to vector<64x128xf32>
    %118 = arith.addf %116, %117 : vector<64x128xf32>
    %119 = arith.negf %118 : vector<64x128xf32>
    %120 = math.exp %119 : vector<64x128xf32>
    %cst_23 = arith.constant 1.000000e+00 : f32
    %121 = vector.broadcast %cst_23 : f32 to vector<64x128xf32>
    %122 = arith.addf %121, %120 : vector<64x128xf32>
    %123 = arith.divf %121, %122 : vector<64x128xf32>
    %124 = vector.extract_strided_slice %123 {offsets = [0, 0], sizes = [32, 128], strides = [1, 1]} : vector<64x128xf32> to vector<32x128xf32>
    %125 = vector.extract_strided_slice %123 {offsets = [32, 0], sizes = [32, 128], strides = [1, 1]} : vector<64x128xf32> to vector<32x128xf32>
    %126 = vector.extract_strided_slice %115 {offsets = [64, 0], sizes = [32, 128], strides = [1, 1]} : vector<96x128xf32> to vector<32x128xf32>
    %127 = vector.extract_strided_slice %109 {offsets = [64, 0], sizes = [32, 128], strides = [1, 1]} : vector<96x128xf32> to vector<32x128xf32>
    %128 = arith.addf %127, %5 : vector<32x128xf32>
    %129 = arith.mulf %124, %128 : vector<32x128xf32>
    %130 = arith.addf %126, %129 : vector<32x128xf32>
    %131 = math.tanh %130 : vector<32x128xf32>
    %cst_24 = arith.constant 1.000000e+00 : f32
    %132 = vector.broadcast %cst_24 : f32 to vector<32x128xf32>
    %133 = arith.subf %132, %125 : vector<32x128xf32>
    %134 = arith.mulf %133, %131 : vector<32x128xf32>
    %135 = arith.mulf %125, %108 : vector<32x128xf32>
    %136 = arith.addf %134, %135 : vector<32x128xf32>
    %137 = vector.shape_cast %17 : vector<1x128xi1> to vector<1x128xi1>
    %138 = vector.broadcast %137 : vector<1x128xi1> to vector<32x128xi1>
    %139 = arith.select %138, %136, %108 : vector<32x128xi1>, vector<32x128xf32>
    %cst_25 = arith.constant dense<0.000000e+00> : vector<96x128xf32>
    %140 = tpu.matmul %2, %139, %cst_25 {dimension_numbers = #tpu.dot_dimension_numbers<[1], [0], [0], [1], [0, 0, 1, 1], [], []>} : vector<96x32xf32>, vector<32x128xf32>, vector<96x128xf32> -> vector<96x128xf32>
    %141 = vector.extract_strided_slice %0 {offsets = [4, 0], sizes = [1, 128], strides = [1, 1]} : vector<6x128xi32> to vector<1x128xi32>
    %142 = vector.broadcast %141 : vector<1x128xi32> to vector<16x128xi32>
    %143 = arith.cmpi eq, %6, %142 : vector<16x128xi32>
    %144 = arith.extui %143 : vector<16x128xi1> to vector<16x128xi32>
    %145 = arith.sitofp %144 : vector<16x128xi32> to vector<16x128xf32>
    %cst_26 = arith.constant dense<0.000000e+00> : vector<96x128xf32>
    %146 = tpu.matmul %1, %145, %cst_26 {dimension_numbers = #tpu.dot_dimension_numbers<[1], [0], [0], [1], [0, 0, 1, 1], [], []>} : vector<96x16xf32>, vector<16x128xf32>, vector<96x128xf32> -> vector<96x128xf32>
    %147 = vector.extract_strided_slice %146 {offsets = [0, 0], sizes = [64, 128], strides = [1, 1]} : vector<96x128xf32> to vector<64x128xf32>
    %148 = vector.extract_strided_slice %140 {offsets = [0, 0], sizes = [64, 128], strides = [1, 1]} : vector<96x128xf32> to vector<64x128xf32>
    %149 = arith.addf %147, %148 : vector<64x128xf32>
    %150 = arith.negf %149 : vector<64x128xf32>
    %151 = math.exp %150 : vector<64x128xf32>
    %cst_27 = arith.constant 1.000000e+00 : f32
    %152 = vector.broadcast %cst_27 : f32 to vector<64x128xf32>
    %153 = arith.addf %152, %151 : vector<64x128xf32>
    %154 = arith.divf %152, %153 : vector<64x128xf32>
    %155 = vector.extract_strided_slice %154 {offsets = [0, 0], sizes = [32, 128], strides = [1, 1]} : vector<64x128xf32> to vector<32x128xf32>
    %156 = vector.extract_strided_slice %154 {offsets = [32, 0], sizes = [32, 128], strides = [1, 1]} : vector<64x128xf32> to vector<32x128xf32>
    %157 = vector.extract_strided_slice %146 {offsets = [64, 0], sizes = [32, 128], strides = [1, 1]} : vector<96x128xf32> to vector<32x128xf32>
    %158 = vector.extract_strided_slice %140 {offsets = [64, 0], sizes = [32, 128], strides = [1, 1]} : vector<96x128xf32> to vector<32x128xf32>
    %159 = arith.addf %158, %5 : vector<32x128xf32>
    %160 = arith.mulf %155, %159 : vector<32x128xf32>
    %161 = arith.addf %157, %160 : vector<32x128xf32>
    %162 = math.tanh %161 : vector<32x128xf32>
    %cst_28 = arith.constant 1.000000e+00 : f32
    %163 = vector.broadcast %cst_28 : f32 to vector<32x128xf32>
    %164 = arith.subf %163, %156 : vector<32x128xf32>
    %165 = arith.mulf %164, %162 : vector<32x128xf32>
    %166 = arith.mulf %156, %139 : vector<32x128xf32>
    %167 = arith.addf %165, %166 : vector<32x128xf32>
    %168 = vector.shape_cast %21 : vector<1x128xi1> to vector<1x128xi1>
    %169 = vector.broadcast %168 : vector<1x128xi1> to vector<32x128xi1>
    %170 = arith.select %169, %167, %139 : vector<32x128xi1>, vector<32x128xf32>
    %cst_29 = arith.constant dense<0.000000e+00> : vector<96x128xf32>
    %171 = tpu.matmul %2, %170, %cst_29 {dimension_numbers = #tpu.dot_dimension_numbers<[1], [0], [0], [1], [0, 0, 1, 1], [], []>} : vector<96x32xf32>, vector<32x128xf32>, vector<96x128xf32> -> vector<96x128xf32>
    %172 = vector.extract_strided_slice %0 {offsets = [5, 0], sizes = [1, 128], strides = [1, 1]} : vector<6x128xi32> to vector<1x128xi32>
    %173 = vector.broadcast %172 : vector<1x128xi32> to vector<16x128xi32>
    %174 = arith.cmpi eq, %6, %173 : vector<16x128xi32>
    %175 = arith.extui %174 : vector<16x128xi1> to vector<16x128xi32>
    %176 = arith.sitofp %175 : vector<16x128xi32> to vector<16x128xf32>
    %cst_30 = arith.constant dense<0.000000e+00> : vector<96x128xf32>
    %177 = tpu.matmul %1, %176, %cst_30 {dimension_numbers = #tpu.dot_dimension_numbers<[1], [0], [0], [1], [0, 0, 1, 1], [], []>} : vector<96x16xf32>, vector<16x128xf32>, vector<96x128xf32> -> vector<96x128xf32>
    %178 = vector.extract_strided_slice %177 {offsets = [0, 0], sizes = [64, 128], strides = [1, 1]} : vector<96x128xf32> to vector<64x128xf32>
    %179 = vector.extract_strided_slice %171 {offsets = [0, 0], sizes = [64, 128], strides = [1, 1]} : vector<96x128xf32> to vector<64x128xf32>
    %180 = arith.addf %178, %179 : vector<64x128xf32>
    %181 = arith.negf %180 : vector<64x128xf32>
    %182 = math.exp %181 : vector<64x128xf32>
    %cst_31 = arith.constant 1.000000e+00 : f32
    %183 = vector.broadcast %cst_31 : f32 to vector<64x128xf32>
    %184 = arith.addf %183, %182 : vector<64x128xf32>
    %185 = arith.divf %183, %184 : vector<64x128xf32>
    %186 = vector.extract_strided_slice %185 {offsets = [0, 0], sizes = [32, 128], strides = [1, 1]} : vector<64x128xf32> to vector<32x128xf32>
    %187 = vector.extract_strided_slice %185 {offsets = [32, 0], sizes = [32, 128], strides = [1, 1]} : vector<64x128xf32> to vector<32x128xf32>
    %188 = vector.extract_strided_slice %177 {offsets = [64, 0], sizes = [32, 128], strides = [1, 1]} : vector<96x128xf32> to vector<32x128xf32>
    %189 = vector.extract_strided_slice %171 {offsets = [64, 0], sizes = [32, 128], strides = [1, 1]} : vector<96x128xf32> to vector<32x128xf32>
    %190 = arith.addf %189, %5 : vector<32x128xf32>
    %191 = arith.mulf %186, %190 : vector<32x128xf32>
    %192 = arith.addf %188, %191 : vector<32x128xf32>
    %193 = math.tanh %192 : vector<32x128xf32>
    %cst_32 = arith.constant 1.000000e+00 : f32
    %194 = vector.broadcast %cst_32 : f32 to vector<32x128xf32>
    %195 = arith.subf %194, %187 : vector<32x128xf32>
    %196 = arith.mulf %195, %193 : vector<32x128xf32>
    %197 = arith.mulf %187, %170 : vector<32x128xf32>
    %198 = arith.addf %196, %197 : vector<32x128xf32>
    %199 = vector.shape_cast %25 : vector<1x128xi1> to vector<1x128xi1>
    %200 = vector.broadcast %199 : vector<1x128xi1> to vector<32x128xi1>
    %201 = arith.select %200, %198, %170 : vector<32x128xi1>, vector<32x128xf32>
    %c0_33 = arith.constant 0 : index
    %c0_34 = arith.constant 0 : index
    %202 = vector.load %arg5[%c0_33, %c0_34] : memref<4x32xf32, #tpu.memory_space<vmem>>, vector<4x32xf32>
    %cst_35 = arith.constant dense<0.000000e+00> : vector<4x128xf32>
    %203 = tpu.matmul %202, %201, %cst_35 {dimension_numbers = #tpu.dot_dimension_numbers<[1], [0], [0], [1], [0, 0, 1, 1], [], []>} : vector<4x32xf32>, vector<32x128xf32>, vector<4x128xf32> -> vector<4x128xf32>
    %c0_36 = arith.constant 0 : index
    %c0_37 = arith.constant 0 : index
    %204 = vector.load %arg6[%c0_36, %c0_37] : memref<4x1xf32, #tpu.memory_space<vmem>>, vector<4x1xf32>
    %205 = vector.broadcast %204 : vector<4x1xf32> to vector<4x128xf32>
    %206 = arith.addf %203, %205 : vector<4x128xf32>
    %c0_38 = arith.constant 0 : index
    %c0_39 = arith.constant 0 : index
    %207 = vector.load %arg7[%c0_38, %c0_39] : memref<4x128xf32, #tpu.memory_space<vmem>>, vector<4x128xf32>
    tpu.vector_store %arg7[%c0_38, %c0_39], %206 {strides = array<i32>} : memref<4x128xf32, #tpu.memory_space<vmem>>, vector<4x128xf32>,
    return
  }
  func.func @transform_0(%arg0: i32) -> (i32, i32) {
    %c0_i32 = arith.constant 0 : i32
    %c0_i32_0 = arith.constant 0 : i32
    return %c0_i32, %arg0 : i32, i32
  }
  func.func @transform_1(%arg0: i32) -> (i32, i32) {
    %c0_i32 = arith.constant 0 : i32
    %c0_i32_0 = arith.constant 0 : i32
    %c0_i32_1 = arith.constant 0 : i32
    return %c0_i32, %c0_i32_0 : i32, i32
  }
  func.func @transform_2(%arg0: i32) -> (i32, i32) {
    %c0_i32 = arith.constant 0 : i32
    %c0_i32_0 = arith.constant 0 : i32
    %c0_i32_1 = arith.constant 0 : i32
    return %c0_i32, %c0_i32_0 : i32, i32
  }
  func.func @transform_3(%arg0: i32) -> (i32, i32) {
    %c0_i32 = arith.constant 0 : i32
    %c0_i32_0 = arith.constant 0 : i32
    %c0_i32_1 = arith.constant 0 : i32
    return %c0_i32, %c0_i32_0 : i32, i32
  }
  func.func @transform_4(%arg0: i32) -> (i32, i32) {
    %c0_i32 = arith.constant 0 : i32
    %c0_i32_0 = arith.constant 0 : i32
    %c0_i32_1 = arith.constant 0 : i32
    return %c0_i32, %c0_i32_0 : i32, i32
  }
  func.func @transform_5(%arg0: i32) -> (i32, i32) {
    %c0_i32 = arith.constant 0 : i32
    %c0_i32_0 = arith.constant 0 : i32
    %c0_i32_1 = arith.constant 0 : i32
    return %c0_i32, %c0_i32_0 : i32, i32
  }
  func.func @transform_6(%arg0: i32) -> (i32, i32) {
    %c0_i32 = arith.constant 0 : i32
    %c0_i32_0 = arith.constant 0 : i32
    return %c0_i32, %arg0 : i32, i32
  }
}

</mosaic_0001>

<llo_original>
// kernel: tpu_custom_call.1
$region0: #{tpu_custom_call.1}
  #allocation0 [shape = 'u32[]', space=smem, size = 0x4, offset = 0x4, fixed_abs, tag = 'smem constant byte address 0x4 - core index']
  #allocation1 [shape = 'u32[144,128]{1,0:T(1,128)}', space=vmem, size = 0x12000, scoped, tag = 'internal scratch']
  %s0 = inlined_call_operand.vmem [shape: s32[6,256], index: 0, kind: input, shape index: {}]
  %s1 = inlined_call_operand.vmem [shape: f32[96,16], index: 1, kind: input, shape index: {}]
  %s2 = inlined_call_operand.vmem [shape: f32[96,32], index: 2, kind: input, shape index: {}]
  %s3 = inlined_call_operand.vmem [shape: f32[32,1], index: 3, kind: input, shape index: {}]
  %s4 = inlined_call_operand.vmem [shape: f32[4,32], index: 4, kind: input, shape index: {}]
  %s5 = inlined_call_operand.vmem [shape: f32[4,1], index: 5, kind: input, shape index: {}]
  %s6 = inlined_call_operand.hbm [shape: f32[4,256], index: 6, kind: output, shape index: {}]
  %s7 = sld [smem:[#allocation0]]
  $region57: #{tpu_custom_call.1} parent=0
    _
  %s9 = ssub.s32 1, %s7
  %s10 = scalar_select 0, %s9, %s7
  $region1: #{tpu_custom_call.1} parent=0
    #allocation2 [shape = 'u8[4096]{0}', space=vmem, size = 0x1000, scoped, tag = 'output window, operand 0']
    #allocation3 [shape = 's32[2]{0}', space=sflag, size = 0x8, scoped, tag = 'scoped memory for tpu_custom_call.1']
    %11 = vsyncpa [#allocation3], 0
    %s12 = scalar_lea.sflag [#allocation3], 1
    %13 = vsyncpa %s12, 0
    loop: start=0, step=1, limit=4
    $region2: #{tpu_custom_call.1} parent=1 // loop_pre_header
      _
    $region3: #{tpu_custom_call.1} parent=1 // loop_header
      %s15 = sphi 0, %s19
      %p16 = scmp.ge.s32.totalorder %s15, 4
      %s25 = sphi 0, %s27
      %s28 = sphi 0, %s25
      %s29 = sphi 0, %s28
      %s45 = sphi 0, %s29
      %s49 = sphi 0, %s49
      %s51 = sphi 0, %s49
      %s52 = sphi 0, %s51
      %s66 = sphi 0, %s52
      %s70 = sphi 0, %s70
      %s72 = sphi 0, %s70
      %s73 = sphi 0, %s72
      %s87 = sphi 0, %s73
      %s91 = sphi 0, %s91
      %s93 = sphi 0, %s91
      %s94 = sphi 0, %s93
      %s108 = sphi 0, %s94
      %s112 = sphi 0, %s112
      %s114 = sphi 0, %s112
      %s115 = sphi 0, %s114
      %s129 = sphi 0, %s115
      %s133 = sphi 0, %s133
      %s135 = sphi 0, %s133
      %s136 = sphi 0, %s135
      %s150 = sphi 0, %s136
      %s156 = sphi 0, %s158
      %s159 = sphi 0, %s156
      %s160 = sphi 0, %s159
      %s176 = sphi 0, %s160
    $region4: #{tpu_custom_call.1} parent=1 // loop_header_branch
      %18 = sbr.rel (%p16) target = $region8
    $region5: #{tpu_custom_call.1} parent=1 // loop_body
      %s20 = ssub.s32 %s15, 1
      %s21 = ssub.s32 %s15, 2
      %s22 = sadd.s32 %s15, 1
      %s23 = ssub.s32 %s15, %s22
      %p24 = scmp.eq.s32.totalorder %s23, 0
      %s26 = sadd.s32 %s25, 1
      %s27 = scalar_select %p24, %s25, %s26
      %p30 = pneg %p24
      %p31 = scmp.eq.s32.totalorder %s15, 1
      %p32 = por %p30, %p31
      %p33 = scmp.ne.s32.totalorder %s25, %s28
      %p34 = scmp.eq.s32.totalorder %s15, 0
      %p35 = por %p33, %p34
      %p36 = scmp.ne.s32.totalorder %s25, %s28
      %p37 = scmp.eq.s32.totalorder %s20, 1
      %p38 = por %p36, %p37
      %p39 = scmp.ne.s32.totalorder %s28, %s29
      %p40 = scmp.eq.s32.totalorder %s20, 0
      %p41 = por %p39, %p40
      %p42 = scmp.ne.s32.totalorder %s28, %s29
      %p43 = scmp.eq.s32.totalorder %s21, 1
      %p44 = por %p42, %p43
      %p46 = scmp.ne.s32.totalorder %s29, %s45
      %p47 = scmp.eq.s32.totalorder %s21, 0
      %p48 = por %p46, %p47
      %s50 = sadd.s32 %s49, 1
      %p53 = scmp.eq.s32.totalorder %s15, 1
      %p54 = scmp.ne.s32.totalorder %s49, %s51
      %p55 = scmp.eq.s32.totalorder %s15, 0
      %p56 = por %p54, %p55
      %p57 = scmp.ne.s32.totalorder %s49, %s51
      %p58 = scmp.eq.s32.totalorder %s20, 1
      %p59 = por %p57, %p58
      %p60 = scmp.ne.s32.totalorder %s51, %s52
      %p61 = scmp.eq.s32.totalorder %s20, 0
      %p62 = por %p60, %p61
      %p63 = scmp.ne.s32.totalorder %s51, %s52
      %p64 = scmp.eq.s32.totalorder %s21, 1
      %p65 = por %p63, %p64
      %p67 = scmp.ne.s32.totalorder %s52, %s66
      %p68 = scmp.eq.s32.totalorder %s21, 0
      %p69 = por %p67, %p68
      %s71 = sadd.s32 %s70, 1
      %p74 = scmp.eq.s32.totalorder %s15, 1
      %p75 = scmp.ne.s32.totalorder %s70, %s72
      %p76 = scmp.eq.s32.totalorder %s15, 0
      %p77 = por %p75, %p76
      %p78 = scmp.ne.s32.totalorder %s70, %s72
      %p79 = scmp.eq.s32.totalorder %s20, 1
      %p80 = por %p78, %p79
      %p81 = scmp.ne.s32.totalorder %s72, %s73
      %p82 = scmp.eq.s32.totalorder %s20, 0
      %p83 = por %p81, %p82
      %p84 = scmp.ne.s32.totalorder %s72, %s73
      %p85 = scmp.eq.s32.totalorder %s21, 1
      %p86 = por %p84, %p85
      %p88 = scmp.ne.s32.totalorder %s73, %s87
      %p89 = scmp.eq.s32.totalorder %s21, 0
      %p90 = por %p88, %p89
      %s92 = sadd.s32 %s91, 1
      %p95 = scmp.eq.s32.totalorder %s15, 1
      %p96 = scmp.ne.s32.totalorder %s91, %s93
      %p97 = scmp.eq.s32.totalorder %s15, 0
      %p98 = por %p96, %p97
      %p99 = scmp.ne.s32.totalorder %s91, %s93
      %p100 = scmp.eq.s32.totalorder %s20, 1
      %p101 = por %p99, %p100
      %p102 = scmp.ne.s32.totalorder %s93, %s94
      %p103 = scmp.eq.s32.totalorder %s20, 0
      %p104 = por %p102, %p103
      %p105 = scmp.ne.s32.totalorder %s93, %s94
      %p106 = scmp.eq.s32.totalorder %s21, 1
      %p107 = por %p105, %p106
      %p109 = scmp.ne.s32.totalorder %s94, %s108
      %p110 = scmp.eq.s32.totalorder %s21, 0
      %p111 = por %p109, %p110
      %s113 = sadd.s32 %s112, 1
      %p116 = scmp.eq.s32.totalorder %s15, 1
      %p117 = scmp.ne.s32.totalorder %s112, %s114
      %p118 = scmp.eq.s32.totalorder %s15, 0
      %p119 = por %p117, %p118
      %p120 = scmp.ne.s32.totalorder %s112, %s114
      %p121 = scmp.eq.s32.totalorder %s20, 1
      %p122 = por %p120, %p121
      %p123 = scmp.ne.s32.totalorder %s114, %s115
      %p124 = scmp.eq.s32.totalorder %s20, 0
      %p125 = por %p123, %p124
      %p126 = scmp.ne.s32.totalorder %s114, %s115
      %p127 = scmp.eq.s32.totalorder %s21, 1
      %p128 = por %p126, %p127
      %p130 = scmp.ne.s32.totalorder %s115, %s129
      %p131 = scmp.eq.s32.totalorder %s21, 0
      %p132 = por %p130, %p131
      %s134 = sadd.s32 %s133, 1
      %p137 = scmp.eq.s32.totalorder %s15, 1
      %p138 = scmp.ne.s32.totalorder %s133, %s135
      %p139 = scmp.eq.s32.totalorder %s15, 0
      %p140 = por %p138, %p139
      %p141 = scmp.ne.s32.totalorder %s133, %s135
      %p142 = scmp.eq.s32.totalorder %s20, 1
      %p143 = por %p141, %p142
      %p144 = scmp.ne.s32.totalorder %s135, %s136
      %p145 = scmp.eq.s32.totalorder %s20, 0
      %p146 = por %p144, %p145
      %p147 = scmp.ne.s32.totalorder %s135, %s136
      %p148 = scmp.eq.s32.totalorder %s21, 1
      %p149 = por %p147, %p148
      %p151 = scmp.ne.s32.totalorder %s136, %s150
      %p152 = scmp.eq.s32.totalorder %s21, 0
      %p153 = por %p151, %p152
      %s154 = ssub.s32 %s15, %s22
      %p155 = scmp.eq.s32.totalorder %s154, 0
      %s157 = sadd.s32 %s156, 1
      %s158 = scalar_select %p155, %s156, %s157
      %p161 = pneg %p155
      %p162 = scmp.eq.s32.totalorder %s15, 1
      %p163 = por %p161, %p162
      %p164 = scmp.ne.s32.totalorder %s156, %s159
      %p165 = scmp.eq.s32.totalorder %s15, 0
      %p166 = por %p164, %p165
      %p167 = scmp.ne.s32.totalorder %s156, %s159
      %p168 = scmp.eq.s32.totalorder %s20, 1
      %p169 = por %p167, %p168
      %p170 = scmp.ne.s32.totalorder %s159, %s160
      %p171 = scmp.eq.s32.totalorder %s20, 0
      %p172 = por %p170, %p171
      %p173 = scmp.ne.s32.totalorder %s159, %s160
      %p174 = scmp.eq.s32.totalorder %s21, 1
      %p175 = por %p173, %p174
      %p177 = scmp.ne.s32.totalorder %s160, %s176
      %p178 = scmp.eq.s32.totalorder %s21, 0
      %p179 = por %p177, %p178
      %p180 = scmp.le.s32.totalorder 1, %s15
      %p181 = scmp.lt.s32.totalorder %s15, 3
      %p182 = pnand %p180, %p181
      %p183 = pneg %p182
      // Predicated region
      $region9: #{tpu_custom_call.1} parent=5 // pred_check
        _
      $region10: #{tpu_custom_call.1} parent=5 // pred_check_branch
        %185 = sbr.rel (%p182) target = $region12
      $region11: #{tpu_custom_call.1} parent=5 // pred_region
        %s186 = ssub.s32 %s15, 1
        // Predicated region
        $region13: #{tpu_custom_call.1} parent=11 // pred_check
          %p187 = pneg %p62
        $region14: #{tpu_custom_call.1} parent=11 // pred_check_branch
          %189 = sbr.rel (%p187) target = $region16
        $region15: #{tpu_custom_call.1} parent=11 // pred_region
          _
        $region16: #{tpu_custom_call.1} parent=11 // pred_fallthru
          _
        // Predicated region
        $region17: #{tpu_custom_call.1} parent=11 // pred_check
          %p190 = pneg %p83
        $region18: #{tpu_custom_call.1} parent=11 // pred_check_branch
          %192 = sbr.rel (%p190) target = $region20
        $region19: #{tpu_custom_call.1} parent=11 // pred_region
          _
        $region20: #{tpu_custom_call.1} parent=11 // pred_fallthru
          _
        // Predicated region
        $region21: #{tpu_custom_call.1} parent=11 // pred_check
          %p193 = pneg %p104
        $region22: #{tpu_custom_call.1} parent=11 // pred_check_branch
          %195 = sbr.rel (%p193) target = $region24
        $region23: #{tpu_custom_call.1} parent=11 // pred_region
          _
        $region24: #{tpu_custom_call.1} parent=11 // pred_fallthru
          _
        // Predicated region
        $region25: #{tpu_custom_call.1} parent=11 // pred_check
          %p196 = pneg %p125
        $region26: #{tpu_custom_call.1} parent=11 // pred_check_branch
          %198 = sbr.rel (%p196) target = $region28
        $region27: #{tpu_custom_call.1} parent=11 // pred_region
          _
        $region28: #{tpu_custom_call.1} parent=11 // pred_fallthru
          _
        // Predicated region
        $region29: #{tpu_custom_call.1} parent=11 // pred_check
          %p199 = pneg %p146
        $region30: #{tpu_custom_call.1} parent=11 // pred_check_branch
          %201 = sbr.rel (%p199) target = $region32
        $region31: #{tpu_custom_call.1} parent=11 // pred_region
          _
        $region32: #{tpu_custom_call.1} parent=11 // pred_fallthru
          _
      $region12: #{tpu_custom_call.1} parent=5 // pred_fallthru
        _
      %p202 = scmp.lt.s32.totalorder %s15, 2
      // Predicated region
      $region33: #{tpu_custom_call.1} parent=5 // pred_check
        %p203 = pneg %p202
      $region34: #{tpu_custom_call.1} parent=5 // pred_check_branch
        %205 = sbr.rel (%p203) target = $region36
      $region35: #{tpu_custom_call.1} parent=5 // pred_region
        // Predicated region
        $region37: #{tpu_custom_call.1} parent=35 // pred_check
          %p206 = pneg %p35
        $region38: #{tpu_custom_call.1} parent=35 // pred_check_branch
          %208 = sbr.rel (%p206) target = $region40
        $region39: #{tpu_custom_call.1} parent=35 // pred_region
          %p209 = scmp.lt.s32.totalorder %s15, 1
          %s210 = scalar_select %p209, %s15, 1
          %s211 = smul.addr %s210, 8
          %s212 = scalar_lea.vmem %s0, %s211
        $region40: #{tpu_custom_call.1} parent=35 // pred_fallthru
          _
      $region36: #{tpu_custom_call.1} parent=5 // pred_fallthru
        _
      %p213 = scmp.le.s32.totalorder 1, %s15
      %p214 = scmp.lt.s32.totalorder %s15, 3
      %p215 = pnand %p213, %p214
      %p216 = pneg %p215
      // Predicated region
      $region41: #{tpu_custom_call.1} parent=5 // pred_check
        _
      $region42: #{tpu_custom_call.1} parent=5 // pred_check_branch
        %218 = sbr.rel (%p215) target = $region44
      $region43: #{tpu_custom_call.1} parent=5 // pred_region
        %s219 = ssub.s32 %s15, 1
        %p220 = scmp.lt.s32.totalorder %s20, 1
        %s221 = scalar_select %p220, %s20, 1
        %s222 = smul.addr %s221, 8
        %s223 = scalar_lea.vmem %s0, %s222
        %p224 = pneg %p41
        %p225 = pneg %p38
        %p226 = pneg %p62
        %p227 = pneg %p59
        %p228 = pneg %p83
        %p229 = pneg %p80
        %p230 = pneg %p104
        %p231 = pneg %p101
        %p232 = pneg %p125
        %p233 = pneg %p122
        %p234 = pneg %p146
        %p235 = pneg %p143
        %p236 = pneg %p172
        %p237 = pneg %p169
        %s238 = sand.u32 %s159, 1
        %s239 = scalar_lea.sflag [#allocation3], %s238
        %s240 = sand.u32 %s159, 1
        %s241 = smul.addr %s240, 4
        %s242 = scalar_lea.vmem [#allocation2], %s241
        %p243 = scmp.lt.s32.totalorder %s20, 1
        %s244 = scalar_select %p243, %s20, 1
        %s245 = smul.addr %s244, 8
        %s246 = scalar_lea.vmem %s0, %s245
        %v247 = vld [vmem:[%s246] sm:$0x3f]
        %v248 = vld [vmem:[%s1] sm:$0xff]
        %v249 = vld [vmem:[%s1 + $0x8] sm:$0xff]
        %v250 = vld [vmem:[%s1 + $0x10] sm:$0xff]
        %v251 = vld [vmem:[%s1 + $0x18] sm:$0xff]
        %v252 = vld [vmem:[%s1 + $0x20] sm:$0xff]
        %v253 = vld [vmem:[%s1 + $0x28] sm:$0xff]
        %v254 = vld [vmem:[%s1 + $0x30] sm:$0xff]
        %v255 = vld [vmem:[%s1 + $0x38] sm:$0xff]
        %v256 = vld [vmem:[%s1 + $0x40] sm:$0xff]
        %v257 = vld [vmem:[%s1 + $0x48] sm:$0xff]
        %v258 = vld [vmem:[%s1 + $0x50] sm:$0xff]
        %v259 = vld [vmem:[%s1 + $0x58] sm:$0xff]
        %v260 = vld [vmem:[%s2] sm:$0xff]
        %v261 = vld [vmem:[%s2 + $0x8] sm:$0xff]
        %v262 = vld [vmem:[%s2 + $0x10] sm:$0xff]
        %v263 = vld [vmem:[%s2 + $0x18] sm:$0xff]
        %v264 = vld [vmem:[%s2 + $0x20] sm:$0xff]
        %v265 = vld [vmem:[%s2 + $0x28] sm:$0xff]
        %v266 = vld [vmem:[%s2 + $0x30] sm:$0xff]
        %v267 = vld [vmem:[%s2 + $0x38] sm:$0xff]
        %v268 = vld [vmem:[%s2 + $0x40] sm:$0xff]
        %v269 = vld [vmem:[%s2 + $0x48] sm:$0xff]
        %v270 = vld [vmem:[%s2 + $0x50] sm:$0xff]
        %v271 = vld [vmem:[%s2 + $0x58] sm:$0xff]
        %v272 = vld [vmem:[%s3] sm:$0xff]
        %v273 = vld [vmem:[%s3 + $0x8] sm:$0xff]
        %v274 = vld [vmem:[%s3 + $0x10] sm:$0xff]
        %v275 = vld [vmem:[%s3 + $0x18] sm:$0xff]
        %277 = vset.pattern.permute.xlu0 0
        %278 = vperm.xlu0 %277, %v272
        %v279 = vpop.permute.xlu0 %278
        %282 = vset.pattern.permute.xlu0 0
        %283 = vperm.xlu0 %282, %v273
        %v284 = vpop.permute.xlu0 %283
        %287 = vset.pattern.permute.xlu0 0
        %288 = vperm.xlu0 %287, %v274
        %v289 = vpop.permute.xlu0 %288
        %292 = vset.pattern.permute.xlu0 0
        %293 = vperm.xlu0 %292, %v275
        %v294 = vpop.permute.xlu0 %293
        %v296 = vlaneseq
        %v297 = vshrl.u32 %v296, 7
        %v298 = vadd.s32 %v297, 8
        %vm299 = vcmp.ne.s32.totalorder %v247, 0
        %v300 = vsel %vm299, 1, 0
        %v301 = vrot.slane %v300, 1
        %vm302 = vcmp.ne.s32.totalorder %v301, 0
        %vm303 = vmand %vm299, %vm302
        %v304 = vrot.slane %v300, 2
        %vm305 = vcmp.ne.s32.totalorder %v304, 0
        %vm306 = vmand %vm303, %vm305
        %v307 = vrot.slane %v300, 3
        %vm308 = vcmp.ne.s32.totalorder %v307, 0
        %vm309 = vmand %vm306, %vm308
        %v310 = vrot.slane %v300, 4
        %vm311 = vcmp.ne.s32.totalorder %v310, 0
        %vm312 = vmand %vm309, %vm311
        %v313 = vlaneseq
        %v314 = vshrl.u32 %v313, 7
        %v315 = vsub.s32 0, %v314
        %v316 = vrot.slane %v247, %v315
        %vm317 = vcmp.eq.s32.totalorder %v297, %v316
        %vm318 = vcmp.eq.s32.totalorder %v298, %v316
        %v319 = vsel %vm317, 1, 0
        %v320 = vsel %vm318, 1, 0
        %v321 = vcvt.s32.f32 %v319
        %v322 = vcvt.s32.f32 %v320
        %vm323 = vcmask 130048
        %v325 = vsel %vm323, %v248, 0
        %v328 = vsel %vm323, %v249, 0
        %v331 = vsel %vm323, %v250, 0
        %v334 = vsel %vm323, %v251, 0
        %v337 = vsel %vm323, %v252, 0
        %v340 = vsel %vm323, %v253, 0
        %v343 = vsel %vm323, %v254, 0
        %v346 = vsel %vm323, %v255, 0
        %v349 = vsel %vm323, %v256, 0
        %v352 = vsel %vm323, %v257, 0
        %v355 = vsel %vm323, %v258, 0
        %v358 = vsel %vm323, %v259, 0
        %360 = vmatprep.subr.mxu0 0.0
        %361 = vmatpush1.msra.mxu0 %v321
        %362 = vmatprep.subr.mxu0 0.0
        %363 = vmatpush1.msra.mxu0 %v322
        %364 = vmatprep.subr.mxu0 0.0
        %365 = vmatpush1.msra.mxu0 0.0
        %366 = vmatprep.subr.mxu0 0.0
        %367 = vmatpush1.msra.mxu0 0.0
        %368 = vmatprep.subr.mxu0 0.0
        %369 = vmatpush1.msra.mxu0 0.0
        %370 = vmatprep.subr.mxu0 0.0
        %371 = vmatpush1.msra.mxu0 0.0
        %372 = vmatprep.subr.mxu0 0.0
        %373 = vmatpush1.msra.mxu0 0.0
        %374 = vmatprep.subr.mxu0 0.0
        %375 = vmatpush1.msra.mxu0 0.0
        %376 = vmatprep.subr.mxu0 0.0
        %377 = vmatpush1.msra.mxu0 0.0
        %378 = vmatprep.subr.mxu0 0.0
        %379 = vmatpush1.msra.mxu0 0.0
        %380 = vmatprep.subr.mxu0 0.0
        %381 = vmatpush1.msra.mxu0 0.0
        %382 = vmatprep.subr.mxu0 0.0
        %383 = vmatpush1.msra.mxu0 0.0
        %384 = vmatprep.subr.mxu0 0.0
        %385 = vmatpush1.msra.mxu0 0.0
        %386 = vmatprep.subr.mxu0 0.0
        %387 = vmatpush1.msra.mxu0 0.0
        %388 = vmatprep.subr.mxu0 0.0
        %389 = vmatpush1.msra.mxu0 0.0
        %390 = vmatprep.subr.mxu0 0.0
        %391 = vmatpush1.msra.mxu0 0.0
        %392 = vmatprep.subr.mxu0 0.0
        %393 = vmatpush1.msra.mxu0 0.0
        %394 = vmatprep.subr.mxu0 0.0
        %395 = vmatpush1.msra.mxu0 0.0
        %396 = vmatprep.subr.mxu0 0.0
        %397 = vmatpush1.msra.mxu0 0.0
        %398 = vmatprep.subr.mxu0 0.0
        %399 = vmatpush1.msra.mxu0 0.0
        %400 = vmatprep.subr.mxu0 0.0
        %401 = vmatpush1.msra.mxu0 0.0
        %402 = vmatprep.subr.mxu0 0.0
        %403 = vmatpush1.msra.mxu0 0.0
        %404 = vmatprep.subr.mxu0 0.0
        %405 = vmatpush1.msra.mxu0 0.0
        %406 = vmatprep.subr.mxu0 0.0
        %407 = vmatpush1.msra.mxu0 0.0
        %408 = vmatprep.subr.mxu0 0.0
        %409 = vmatpush1.msra.mxu0 0.0
        %410 = vmatprep.subr.mxu0 0.0
        %411 = vmatpush1.msra.mxu0 0.0
        %412 = vmatprep.subr.mxu0 0.0
        %413 = vmatpush1.msra.mxu0 0.0
        %414 = vmatprep.subr.mxu0 0.0
        %415 = vmatpush1.msra.mxu0 0.0
        %416 = vmatprep.subr.mxu0 0.0
        %417 = vmatpush1.msra.mxu0 0.0
        %418 = vmatprep.subr.mxu0 0.0
        %419 = vmatpush1.msra.mxu0 0.0
        %420 = vmatprep.subr.mxu0 0.0
        %421 = vmatpush1.msra.mxu0 0.0
        %422 = vmatprep.subr.mxu0 0.0
        %423 = vmatpush1.msra.mxu0 0.0
        %424 = vmatprep.mubr.f32.mxu0 0.0
        %425 = vmatmul.mubr.f32.gmra.mrb[0].mxu0 %v325
        %v426 = vpop.f32.mrb[0].mxu0
        %v427 = vadd.f32 0.0, %v426
        %v428 = vpop.f32.mrb[0].mxu0
        %429 = vmatprep.mubr.f32.mxu0 0.0
        %430 = vmatmul.mubr.f32.gmra.mrb[0].mxu0 %v328
        %v431 = vpop.f32.mrb[0].mxu0
        %v432 = vadd.f32 0.0, %v431
        %v433 = vpop.f32.mrb[0].mxu0
        %434 = vmatprep.mubr.f32.mxu0 0.0
        %435 = vmatmul.mubr.f32.gmra.mrb[0].mxu0 %v331
        %v436 = vpop.f32.mrb[0].mxu0
        %v437 = vadd.f32 0.0, %v436
        %v438 = vpop.f32.mrb[0].mxu0
        %439 = vmatprep.mubr.f32.mxu0 0.0
        %440 = vmatmul.mubr.f32.gmra.mrb[0].mxu0 %v334
        %v441 = vpop.f32.mrb[0].mxu0
        %v442 = vadd.f32 0.0, %v441
        %v443 = vpop.f32.mrb[0].mxu0
        %444 = vmatprep.mubr.f32.mxu0 0.0
        %445 = vmatmul.mubr.f32.gmra.mrb[0].mxu0 %v337
        %v446 = vpop.f32.mrb[0].mxu0
        %v447 = vadd.f32 0.0, %v446
        %v448 = vpop.f32.mrb[0].mxu0
        %449 = vmatprep.mubr.f32.mxu0 0.0
        %450 = vmatmul.mubr.f32.gmra.mrb[0].mxu0 %v340
        %v451 = vpop.f32.mrb[0].mxu0
        %v452 = vadd.f32 0.0, %v451
        %v453 = vpop.f32.mrb[0].mxu0
        %454 = vmatprep.mubr.f32.mxu0 0.0
        %455 = vmatmul.mubr.f32.gmra.mrb[0].mxu0 %v343
        %v456 = vpop.f32.mrb[0].mxu0
        %v457 = vadd.f32 0.0, %v456
        %v458 = vpop.f32.mrb[0].mxu0
        %459 = vmatprep.mubr.f32.mxu0 0.0
        %460 = vmatmul.mubr.f32.gmra.mrb[0].mxu0 %v346
        %v461 = vpop.f32.mrb[0].mxu0
        %v462 = vadd.f32 0.0, %v461
        %v463 = vpop.f32.mrb[0].mxu0
        %464 = vmatprep.mubr.f32.mxu0 0.0
        %465 = vmatmul.mubr.f32.gmra.mrb[0].mxu0 %v349
        %v466 = vpop.f32.mrb[0].mxu0
        %v467 = vadd.f32 0.0, %v466
        %v468 = vpop.f32.mrb[0].mxu0
        %469 = vmatprep.mubr.f32.mxu0 0.0
        %470 = vmatmul.mubr.f32.gmra.mrb[0].mxu0 %v352
        %v471 = vpop.f32.mrb[0].mxu0
        %v472 = vadd.f32 0.0, %v471
        %v473 = vpop.f32.mrb[0].mxu0
        %474 = vmatprep.mubr.f32.mxu0 0.0
        %475 = vmatmul.mubr.f32.gmra.mrb[0].mxu0 %v355
        %v476 = vpop.f32.mrb[0].mxu0
        %v477 = vadd.f32 0.0, %v476
        %v478 = vpop.f32.mrb[0].mxu0
        %479 = vmatprep.mubr.f32.mxu0 0.0
        %480 = vmatmul.mubr.f32.gmra.mrb[0].mxu0 %v358
        %v481 = vpop.f32.mrb[0].mxu0
        %v482 = vadd.f32 0.0, %v481
        %v483 = vpop.f32.mrb[0].mxu0
        %484 = vdwg.mxu0
        %v485 = vxor.u32 %v427, 2147483648
        %v486 = vxor.u32 %v432, 2147483648
        %v487 = vxor.u32 %v437, 2147483648
        %v488 = vxor.u32 %v442, 2147483648
        %v489 = vxor.u32 %v447, 2147483648
        %v490 = vxor.u32 %v452, 2147483648
        %v491 = vxor.u32 %v457, 2147483648
        %v492 = vxor.u32 %v462, 2147483648
        %v493 = vmul.f32 %v485, 1.442695
        %v494 = vpow.pop %v493
        %v495 = vmul.f32 %v486, 1.442695
        %v496 = vpow.pop %v495
        %v497 = vmul.f32 %v487, 1.442695
        %v498 = vpow.pop %v497
        %v499 = vmul.f32 %v488, 1.442695
        %v500 = vpow.pop %v499
        %v501 = vmul.f32 %v489, 1.442695
        %v502 = vpow.pop %v501
        %v503 = vmul.f32 %v490, 1.442695
        %v504 = vpow.pop %v503
        %v505 = vmul.f32 %v491, 1.442695
        %v506 = vpow.pop %v505
        %v507 = vmul.f32 %v492, 1.442695
        %v508 = vpow.pop %v507
        %v509 = vadd.f32 %v494, 1.0
        %v510 = vadd.f32 %v496, 1.0
        %v511 = vadd.f32 %v498, 1.0
        %v512 = vadd.f32 %v500, 1.0
        %v513 = vadd.f32 %v502, 1.0
        %v514 = vadd.f32 %v504, 1.0
        %v515 = vadd.f32 %v506, 1.0
        %v516 = vadd.f32 %v508, 1.0
        %v517 = vrcp.pop %v509
        %v518 = vmul.f32 1.0, %v517
        %v519 = vrcp.pop %v510
        %v520 = vmul.f32 1.0, %v519
        %v521 = vrcp.pop %v511
        %v522 = vmul.f32 1.0, %v521
        %v523 = vrcp.pop %v512
        %v524 = vmul.f32 1.0, %v523
        %v525 = vrcp.pop %v513
        %v526 = vmul.f32 1.0, %v525
        %v527 = vrcp.pop %v514
        %v528 = vmul.f32 1.0, %v527
        %v529 = vrcp.pop %v515
        %v530 = vmul.f32 1.0, %v529
        %v531 = vrcp.pop %v516
        %v532 = vmul.f32 1.0, %v531
        %v533 = vmul.f32 %v518, %v279
        %v534 = vmul.f32 %v520, %v284
        %v535 = vmul.f32 %v522, %v289
        %v536 = vmul.f32 %v524, %v294
        %v537 = vadd.f32 %v467, %v533
        %v538 = vadd.f32 %v472, %v534
        %v539 = vadd.f32 %v477, %v535
        %v540 = vadd.f32 %v482, %v536
        %v541 = vtanh.pop %v537
        %v542 = vtanh.pop %v538
        %v543 = vtanh.pop %v539
        %v544 = vtanh.pop %v540
        %v545 = vsub.f32 1.0, %v526
        %v546 = vsub.f32 1.0, %v528
        %v547 = vsub.f32 1.0, %v530
        %v548 = vsub.f32 1.0, %v532
        %v549 = vmul.f32 %v545, %v541
        %v550 = vmul.f32 %v546, %v542
        %v551 = vmul.f32 %v547, %v543
        %v552 = vmul.f32 %v548, %v544
        %vm553 = vcmask 261120
        %v555 = vsel %vm553, %v260, 0
        %v558 = vsel %vm553, %v261, 0
        %v561 = vsel %vm553, %v262, 0
        %v564 = vsel %vm553, %v263, 0
        %v567 = vsel %vm553, %v264, 0
        %v570 = vsel %vm553, %v265, 0
        %v573 = vsel %vm553, %v266, 0
        %v576 = vsel %vm553, %v267, 0
        %v579 = vsel %vm553, %v268, 0
        %v582 = vsel %vm553, %v269, 0
        %v585 = vsel %vm553, %v270, 0
        %v588 = vsel %vm553, %v271, 0
        %590 = vmatprep.subr.mxu0 0.0
        %591 = vmatpush1.msra.mxu0 %v549
        %592 = vmatprep.subr.mxu0 0.0
        %593 = vmatpush1.msra.mxu0 %v550
        %594 = vmatprep.subr.mxu0 0.0
        %595 = vmatpush1.msra.mxu0 %v551
        %596 = vmatprep.subr.mxu0 0.0
        %597 = vmatpush1.msra.mxu0 %v552
        %598 = vmatprep.subr.mxu0 0.0
        %599 = vmatpush1.msra.mxu0 0.0
        %600 = vmatprep.subr.mxu0 0.0
        %601 = vmatpush1.msra.mxu0 0.0
        %602 = vmatprep.subr.mxu0 0.0
        %603 = vmatpush1.msra.mxu0 0.0
        %604 = vmatprep.subr.mxu0 0.0
        %605 = vmatpush1.msra.mxu0 0.0
        %606 = vmatprep.subr.mxu0 0.0
        %607 = vmatpush1.msra.mxu0 0.0
        %608 = vmatprep.subr.mxu0 0.0
        %609 = vmatpush1.msra.mxu0 0.0
        %610 = vmatprep.subr.mxu0 0.0
        %611 = vmatpush1.msra.mxu0 0.0
        %612 = vmatprep.subr.mxu0 0.0
        %613 = vmatpush1.msra.mxu0 0.0
        %614 = vmatprep.subr.mxu0 0.0
        %615 = vmatpush1.msra.mxu0 0.0
        %616 = vmatprep.subr.mxu0 0.0
        %617 = vmatpush1.msra.mxu0 0.0
        %618 = vmatprep.subr.mxu0 0.0
        %619 = vmatpush1.msra.mxu0 0.0
        %620 = vmatprep.subr.mxu0 0.0
        %621 = vmatpush1.msra.mxu0 0.0
        %622 = vmatprep.subr.mxu0 0.0
        %623 = vmatpush1.msra.mxu0 0.0
        %624 = vmatprep.subr.mxu0 0.0
        %625 = vmatpush1.msra.mxu0 0.0
        %626 = vmatprep.subr.mxu0 0.0
        %627 = vmatpush1.msra.mxu0 0.0
        %628 = vmatprep.subr.mxu0 0.0
        %629 = vmatpush1.msra.mxu0 0.0
        %630 = vmatprep.subr.mxu0 0.0
        %631 = vmatpush1.msra.mxu0 0.0
        %632 = vmatprep.subr.mxu0 0.0
        %633 = vmatpush1.msra.mxu0 0.0
        %634 = vmatprep.subr.mxu0 0.0
        %635 = vmatpush1.msra.mxu0 0.0
        %636 = vmatprep.subr.mxu0 0.0
        %637 = vmatpush1.msra.mxu0 0.0
        %638 = vmatprep.subr.mxu0 0.0
        %639 = vmatpush1.msra.mxu0 0.0
        %640 = vmatprep.subr.mxu0 0.0
        %641 = vmatpush1.msra.mxu0 0.0
        %642 = vmatprep.subr.mxu0 0.0
        %643 = vmatpush1.msra.mxu0 0.0
        %644 = vmatprep.subr.mxu0 0.0
        %645 = vmatpush1.msra.mxu0 0.0
        %646 = vmatprep.subr.mxu0 0.0
        %647 = vmatpush1.msra.mxu0 0.0
        %648 = vmatprep.subr.mxu0 0.0
        %649 = vmatpush1.msra.mxu0 0.0
        %650 = vmatprep.subr.mxu0 0.0
        %651 = vmatpush1.msra.mxu0 0.0
        %652 = vmatprep.subr.mxu0 0.0
        %653 = vmatpush1.msra.mxu0 0.0
        %654 = vmatprep.mubr.f32.mxu0 0.0
        %655 = vmatmul.mubr.f32.gmra.mrb[0].mxu0 %v555
        %v656 = vpop.f32.mrb[0].mxu0
        %v657 = vadd.f32 0.0, %v656
        %v658 = vpop.f32.mrb[0].mxu0
        %659 = vmatprep.mubr.f32.mxu0 0.0
        %660 = vmatmul.mubr.f32.gmra.mrb[0].mxu0 %v558
        %v661 = vpop.f32.mrb[0].mxu0
        %v662 = vadd.f32 0.0, %v661
        %v663 = vpop.f32.mrb[0].mxu0
        %664 = vmatprep.mubr.f32.mxu0 0.0
        %665 = vmatmul.mubr.f32.gmra.mrb[0].mxu0 %v561
        %v666 = vpop.f32.mrb[0].mxu0
        %v667 = vadd.f32 0.0, %v666
        %v668 = vpop.f32.mrb[0].mxu0
        %669 = vmatprep.mubr.f32.mxu0 0.0
        %670 = vmatmul.mubr.f32.gmra.mrb[0].mxu0 %v564
        %v671 = vpop.f32.mrb[0].mxu0
        %v672 = vadd.f32 0.0, %v671
        %v673 = vpop.f32.mrb[0].mxu0
        %674 = vmatprep.mubr.f32.mxu0 0.0
        %675 = vmatmul.mubr.f32.gmra.mrb[0].mxu0 %v567
        %v676 = vpop.f32.mrb[0].mxu0
        %v677 = vadd.f32 0.0, %v676
        %v678 = vpop.f32.mrb[0].mxu0
        %679 = vmatprep.mubr.f32.mxu0 0.0
        %680 = vmatmul.mubr.f32.gmra.mrb[0].mxu0 %v570
        %v681 = vpop.f32.mrb[0].mxu0
        %v682 = vadd.f32 0.0, %v681
        %v683 = vpop.f32.mrb[0].mxu0
        %684 = vmatprep.mubr.f32.mxu0 0.0
        %685 = vmatmul.mubr.f32.gmra.mrb[0].mxu0 %v573
        %v686 = vpop.f32.mrb[0].mxu0
        %v687 = vadd.f32 0.0, %v686
        %v688 = vpop.f32.mrb[0].mxu0
        %689 = vmatprep.mubr.f32.mxu0 0.0
        %690 = vmatmul.mubr.f32.gmra.mrb[0].mxu0 %v576
        %v691 = vpop.f32.mrb[0].mxu0
        %v692 = vadd.f32 0.0, %v691
        %v693 = vpop.f32.mrb[0].mxu0
        %694 = vmatprep.mubr.f32.mxu0 0.0
        %695 = vmatmul.mubr.f32.gmra.mrb[0].mxu0 %v579
        %v696 = vpop.f32.mrb[0].mxu0
        %v697 = vadd.f32 0.0, %v696
        %v698 = vpop.f32.mrb[0].mxu0
        %699 = vmatprep.mubr.f32.mxu0 0.0
        %700 = vmatmul.mubr.f32.gmra.mrb[0].mxu0 %v582
        %v701 = vpop.f32.mrb[0].mxu0
        %v702 = vadd.f32 0.0, %v701
        %v703 = vpop.f32.mrb[0].mxu0
        %704 = vmatprep.mubr.f32.mxu0 0.0
        %705 = vmatmul.mubr.f32.gmra.mrb[0].mxu0 %v585
        %v706 = vpop.f32.mrb[0].mxu0
        %v707 = vadd.f32 0.0, %v706
        %v708 = vpop.f32.mrb[0].mxu0
        %709 = vmatprep.mubr.f32.mxu0 0.0
        %710 = vmatmul.mubr.f32.gmra.mrb[0].mxu0 %v588
        %v711 = vpop.f32.mrb[0].mxu0
        %v712 = vadd.f32 0.0, %v711
        %v713 = vpop.f32.mrb[0].mxu0
        %714 = vdwg.mxu0
        %v715 = vlaneseq
        %v716 = vshrl.u32 %v715, 7
        %v717 = vsub.s32 1, %v716
        %v718 = vrot.slane %v247, %v717
        %vm719 = vcmp.eq.s32.totalorder %v297, %v718
        %vm720 = vcmp.eq.s32.totalorder %v298, %v718
        %v721 = vsel %vm719, 1, 0
        %v722 = vsel %vm720, 1, 0
        %v723 = vcvt.s32.f32 %v721
        %v724 = vcvt.s32.f32 %v722
        %725 = vmatprep.subr.mxu0 0.0
        %726 = vmatpush1.msra.mxu0 %v723
        %727 = vmatprep.subr.mxu0 0.0
        %728 = vmatpush1.msra.mxu0 %v724
        %729 = vmatprep.subr.mxu0 0.0
        %730 = vmatpush1.msra.mxu0 0.0
        %731 = vmatprep.subr.mxu0 0.0
        %732 = vmatpush1.msra.mxu0 0.0
        %733 = vmatprep.subr.mxu0 0.0
        %734 = vmatpush1.msra.mxu0 0.0
        %735 = vmatprep.subr.mxu0 0.0
        %736 = vmatpush1.msra.mxu0 0.0
        %737 = vmatprep.subr.mxu0 0.0
        %738 = vmatpush1.msra.mxu0 0.0
        %739 = vmatprep.subr.mxu0 0.0
        %740 = vmatpush1.msra.mxu0 0.0
        %741 = vmatprep.subr.mxu0 0.0
        %742 = vmatpush1.msra.mxu0 0.0
        %743 = vmatprep.subr.mxu0 0.0
        %744 = vmatpush1.msra.mxu0 0.0
        %745 = vmatprep.subr.mxu0 0.0
        %746 = vmatpush1.msra.mxu0 0.0
        %747 = vmatprep.subr.mxu0 0.0
        %748 = vmatpush1.msra.mxu0 0.0
        %749 = vmatprep.subr.mxu0 0.0
        %750 = vmatpush1.msra.mxu0 0.0
        %751 = vmatprep.subr.mxu0 0.0
        %752 = vmatpush1.msra.mxu0 0.0
        %753 = vmatprep.subr.mxu0 0.0
        %754 = vmatpush1.msra.mxu0 0.0
        %755 = vmatprep.subr.mxu0 0.0
        %756 = vmatpush1.msra.mxu0 0.0
        %757 = vmatprep.subr.mxu0 0.0
        %758 = vmatpush1.msra.mxu0 0.0
        %759 = vmatprep.subr.mxu0 0.0
        %760 = vmatpush1.msra.mxu0 0.0
        %761 = vmatprep.subr.mxu0 0.0
        %762 = vmatpush1.msra.mxu0 0.0
        %763 = vmatprep.subr.mxu0 0.0
        %764 = vmatpush1.msra.mxu0 0.0
        %765 = vmatprep.subr.mxu0 0.0
        %766 = vmatpush1.msra.mxu0 0.0
        %767 = vmatprep.subr.mxu0 0.0
        %768 = vmatpush1.msra.mxu0 0.0
        %769 = vmatprep.subr.mxu0 0.0
        %770 = vmatpush1.msra.mxu0 0.0
        %771 = vmatprep.subr.mxu0 0.0
        %772 = vmatpush1.msra.mxu0 0.0
        %773 = vmatprep.subr.mxu0 0.0
        %774 = vmatpush1.msra.mxu0 0.0
        %775 = vmatprep.subr.mxu0 0.0
        %776 = vmatpush1.msra.mxu0 0.0
        %777 = vmatprep.subr.mxu0 0.0
        %778 = vmatpush1.msra.mxu0 0.0
        %779 = vmatprep.subr.mxu0 0.0
        %780 = vmatpush1.msra.mxu0 0.0
        %781 = vmatprep.subr.mxu0 0.0
        %782 = vmatpush1.msra.mxu0 0.0
        %783 = vmatprep.subr.mxu0 0.0
        %784 = vmatpush1.msra.mxu0 0.0
        %785 = vmatprep.subr.mxu0 0.0
        %786 = vmatpush1.msra.mxu0 0.0
        %787 = vmatprep.subr.mxu0 0.0
        %788 = vmatpush1.msra.mxu0 0.0
        %789 = vmatprep.mubr.f32.mxu0 0.0
        %790 = vmatmul.mubr.f32.gmra.mrb[0].mxu0 %v325
        %v791 = vpop.f32.mrb[0].mxu0
        %v792 = vadd.f32 0.0, %v791
        %v793 = vpop.f32.mrb[0].mxu0
        %794 = vmatprep.mubr.f32.mxu0 0.0
        %795 = vmatmul.mubr.f32.gmra.mrb[0].mxu0 %v328
        %v796 = vpop.f32.mrb[0].mxu0
        %v797 = vadd.f32 0.0, %v796
        %v798 = vpop.f32.mrb[0].mxu0
        %799 = vmatprep.mubr.f32.mxu0 0.0
        %800 = vmatmul.mubr.f32.gmra.mrb[0].mxu0 %v331
        %v801 = vpop.f32.mrb[0].mxu0
        %v802 = vadd.f32 0.0, %v801
        %v803 = vpop.f32.mrb[0].mxu0
        %804 = vmatprep.mubr.f32.mxu0 0.0
        %805 = vmatmul.mubr.f32.gmra.mrb[0].mxu0 %v334
        %v806 = vpop.f32.mrb[0].mxu0
        %v807 = vadd.f32 0.0, %v806
        %v808 = vpop.f32.mrb[0].mxu0
        %809 = vmatprep.mubr.f32.mxu0 0.0
        %810 = vmatmul.mubr.f32.gmra.mrb[0].mxu0 %v337
        %v811 = vpop.f32.mrb[0].mxu0
        %v812 = vadd.f32 0.0, %v811
        %v813 = vpop.f32.mrb[0].mxu0
        %814 = vmatprep.mubr.f32.mxu0 0.0
        %815 = vmatmul.mubr.f32.gmra.mrb[0].mxu0 %v340
        %v816 = vpop.f32.mrb[0].mxu0
        %v817 = vadd.f32 0.0, %v816
        %v818 = vpop.f32.mrb[0].mxu0
        %819 = vmatprep.mubr.f32.mxu0 0.0
        %820 = vmatmul.mubr.f32.gmra.mrb[0].mxu0 %v343
        %v821 = vpop.f32.mrb[0].mxu0
        %v822 = vadd.f32 0.0, %v821
        %v823 = vpop.f32.mrb[0].mxu0
        %824 = vmatprep.mubr.f32.mxu0 0.0
        %825 = vmatmul.mubr.f32.gmra.mrb[0].mxu0 %v346
        %v826 = vpop.f32.mrb[0].mxu0
        %v827 = vadd.f32 0.0, %v826
        %v828 = vpop.f32.mrb[0].mxu0
        %829 = vmatprep.mubr.f32.mxu0 0.0
        %830 = vmatmul.mubr.f32.gmra.mrb[0].mxu0 %v349
        %v831 = vpop.f32.mrb[0].mxu0
        %v832 = vadd.f32 0.0, %v831
        %v833 = vpop.f32.mrb[0].mxu0
        %834 = vmatprep.mubr.f32.mxu0 0.0
        %835 = vmatmul.mubr.f32.gmra.mrb[0].mxu0 %v352
        %v836 = vpop.f32.mrb[0].mxu0
        %v837 = vadd.f32 0.0, %v836
        %v838 = vpop.f32.mrb[0].mxu0
        %839 = vmatprep.mubr.f32.mxu0 0.0
        %840 = vmatmul.mubr.f32.gmra.mrb[0].mxu0 %v355
        %v841 = vpop.f32.mrb[0].mxu0
        %v842 = vadd.f32 0.0, %v841
        %v843 = vpop.f32.mrb[0].mxu0
        %844 = vmatprep.mubr.f32.mxu0 0.0
        %845 = vmatmul.mubr.f32.gmra.mrb[0].mxu0 %v358
        %v846 = vpop.f32.mrb[0].mxu0
        %v847 = vadd.f32 0.0, %v846
        %v848 = vpop.f32.mrb[0].mxu0
        %849 = vdwg.mxu0
        %v850 = vadd.f32 %v792, %v657
        %v851 = vadd.f32 %v797, %v662
        %v852 = vadd.f32 %v802, %v667
        %v853 = vadd.f32 %v807, %v672
        %v854 = vadd.f32 %v812, %v677
        %v855 = vadd.f32 %v817, %v682
        %v856 = vadd.f32 %v822, %v687
        %v857 = vadd.f32 %v827, %v692
        %v858 = vxor.u32 %v850, 2147483648
        %v859 = vxor.u32 %v851, 2147483648
        %v860 = vxor.u32 %v852, 2147483648
        %v861 = vxor.u32 %v853, 2147483648
        %v862 = vxor.u32 %v854, 2147483648
        %v863 = vxor.u32 %v855, 2147483648
        %v864 = vxor.u32 %v856, 2147483648
        %v865 = vxor.u32 %v857, 2147483648
        %v866 = vmul.f32 %v858, 1.442695
        %v867 = vpow.pop %v866
        %v868 = vmul.f32 %v859, 1.442695
        %v869 = vpow.pop %v868
        %v870 = vmul.f32 %v860, 1.442695
        %v871 = vpow.pop %v870
        %v872 = vmul.f32 %v861, 1.442695
        %v873 = vpow.pop %v872
        %v874 = vmul.f32 %v862, 1.442695
        %v875 = vpow.pop %v874
        %v876 = vmul.f32 %v863, 1.442695
        %v877 = vpow.pop %v876
        %v878 = vmul.f32 %v864, 1.442695
        %v879 = vpow.pop %v878
        %v880 = vmul.f32 %v865, 1.442695
        %v881 = vpow.pop %v880
        %v882 = vadd.f32 %v867, 1.0
        %v883 = vadd.f32 %v869, 1.0
        %v884 = vadd.f32 %v871, 1.0
        %v885 = vadd.f32 %v873, 1.0
        %v886 = vadd.f32 %v875, 1.0
        %v887 = vadd.f32 %v877, 1.0
        %v888 = vadd.f32 %v879, 1.0
        %v889 = vadd.f32 %v881, 1.0
        %v890 = vrcp.pop %v882
        %v891 = vmul.f32 1.0, %v890
        %v892 = vrcp.pop %v883
        %v893 = vmul.f32 1.0, %v892
        %v894 = vrcp.pop %v884
        %v895 = vmul.f32 1.0, %v894
        %v896 = vrcp.pop %v885
        %v897 = vmul.f32 1.0, %v896
        %v898 = vrcp.pop %v886
        %v899 = vmul.f32 1.0, %v898
        %v900 = vrcp.pop %v887
        %v901 = vmul.f32 1.0, %v900
        %v902 = vrcp.pop %v888
        %v903 = vmul.f32 1.0, %v902
        %v904 = vrcp.pop %v889
        %v905 = vmul.f32 1.0, %v904
        %v906 = vadd.f32 %v697, %v279
        %v907 = vadd.f32 %v702, %v284
        %v908 = vadd.f32 %v707, %v289
        %v909 = vadd.f32 %v712, %v294
        %v910 = vmul.f32 %v891, %v906
        %v911 = vmul.f32 %v893, %v907
        %v912 = vmul.f32 %v895, %v908
        %v913 = vmul.f32 %v897, %v909
        %v914 = vadd.f32 %v832, %v910
        %v915 = vadd.f32 %v837, %v911
        %v916 = vadd.f32 %v842, %v912
        %v917 = vadd.f32 %v847, %v913
        %v918 = vtanh.pop %v914
        %v919 = vtanh.pop %v915
        %v920 = vtanh.pop %v916
        %v921 = vtanh.pop %v917
        %v922 = vsub.f32 1.0, %v899
        %v923 = vsub.f32 1.0, %v901
        %v924 = vsub.f32 1.0, %v903
        %v925 = vsub.f32 1.0, %v905
        %v926 = vmul.f32 %v922, %v918
        %v927 = vmul.f32 %v923, %v919
        %v928 = vmul.f32 %v924, %v920
        %v929 = vmul.f32 %v925, %v921
        %v930 = vmul.f32 %v899, %v549
        %v931 = vmul.f32 %v901, %v550
        %v932 = vmul.f32 %v903, %v551
        %v933 = vmul.f32 %v905, %v552
        %v934 = vadd.f32 %v926, %v930
        %v935 = vadd.f32 %v927, %v931
        %v936 = vadd.f32 %v928, %v932
        %v937 = vadd.f32 %v929, %v933
        %v938 = vlaneseq
        %v939 = vshrl.u32 %v938, 7
        %v940 = vsub.s32 0, %v939
        %v941 = vrot.slane %v300, %v940
        %vm942 = vcmp.eq.s32.totalorder %v941, 1
        %v943 = vsel %vm942, %v934, %v549
        %v944 = vsel %vm942, %v935, %v550
        %v945 = vsel %vm942, %v936, %v551
        %v946 = vsel %vm942, %v937, %v552
        %947 = vmatprep.subr.mxu0 0.0
        %948 = vmatpush1.msra.mxu0 %v943
        %949 = vmatprep.subr.mxu0 0.0
        %950 = vmatpush1.msra.mxu0 %v944
        %951 = vmatprep.subr.mxu0 0.0
        %952 = vmatpush1.msra.mxu0 %v945
        %953 = vmatprep.subr.mxu0 0.0
        %954 = vmatpush1.msra.mxu0 %v946
        %955 = vmatprep.subr.mxu0 0.0
        %956 = vmatpush1.msra.mxu0 0.0
        %957 = vmatprep.subr.mxu0 0.0
        %958 = vmatpush1.msra.mxu0 0.0
        %959 = vmatprep.subr.mxu0 0.0
        %960 = vmatpush1.msra.mxu0 0.0
        %961 = vmatprep.subr.mxu0 0.0
        %962 = vmatpush1.msra.mxu0 0.0
        %963 = vmatprep.subr.mxu0 0.0
        %964 = vmatpush1.msra.mxu0 0.0
        %965 = vmatprep.subr.mxu0 0.0
        %966 = vmatpush1.msra.mxu0 0.0
        %967 = vmatprep.subr.mxu0 0.0
        %968 = vmatpush1.msra.mxu0 0.0
        %969 = vmatprep.subr.mxu0 0.0
        %970 = vmatpush1.msra.mxu0 0.0
        %971 = vmatprep.subr.mxu0 0.0
        %972 = vmatpush1.msra.mxu0 0.0
        %973 = vmatprep.subr.mxu0 0.0
        %974 = vmatpush1.msra.mxu0 0.0
        %975 = vmatprep.subr.mxu0 0.0
        %976 = vmatpush1.msra.mxu0 0.0
        %977 = vmatprep.subr.mxu0 0.0
        %978 = vmatpush1.msra.mxu0 0.0
        %979 = vmatprep.subr.mxu0 0.0
        %980 = vmatpush1.msra.mxu0 0.0
        %981 = vmatprep.subr.mxu0 0.0
        %982 = vmatpush1.msra.mxu0 0.0
        %983 = vmatprep.subr.mxu0 0.0
        %984 = vmatpush1.msra.mxu0 0.0
        %985 = vmatprep.subr.mxu0 0.0
        %986 = vmatpush1.msra.mxu0 0.0
        %987 = vmatprep.subr.mxu0 0.0
        %988 = vmatpush1.msra.mxu0 0.0
        %989 = vmatprep.subr.mxu0 0.0
        %990 = vmatpush1.msra.mxu0 0.0
        %991 = vmatprep.subr.mxu0 0.0
        %992 = vmatpush1.msra.mxu0 0.0
        %993 = vmatprep.subr.mxu0 0.0
        %994 = vmatpush1.msra.mxu0 0.0
        %995 = vmatprep.subr.mxu0 0.0
        %996 = vmatpush1.msra.mxu0 0.0
        %997 = vmatprep.subr.mxu0 0.0
        %998 = vmatpush1.msra.mxu0 0.0
        %999 = vmatprep.subr.mxu0 0.0
        %1000 = vmatpush1.msra.mxu0 0.0
        %1001 = vmatprep.subr.mxu0 0.0
        %1002 = vmatpush1.msra.mxu0 0.0
        %1003 = vmatprep.subr.mxu0 0.0
        %1004 = vmatpush1.msra.mxu0 0.0
        %1005 = vmatprep.subr.mxu0 0.0
        %1006 = vmatpush1.msra.mxu0 0.0
        %1007 = vmatprep.subr.mxu0 0.0
        %1008 = vmatpush1.msra.mxu0 0.0
        %1009 = vmatprep.subr.mxu0 0.0
        %1010 = vmatpush1.msra.mxu0 0.0
        %1011 = vmatprep.mubr.f32.mxu0 0.0
        %1012 = vmatmul.mubr.f32.gmra.mrb[0].mxu0 %v555
        %v1013 = vpop.f32.mrb[0].mxu0
        %v1014 = vadd.f32 0.0, %v1013
        %v1015 = vpop.f32.mrb[0].mxu0
        %1016 = vmatprep.mubr.f32.mxu0 0.0
        %1017 = vmatmul.mubr.f32.gmra.mrb[0].mxu0 %v558
        %v1018 = vpop.f32.mrb[0].mxu0
        %v1019 = vadd.f32 0.0, %v1018
        %v1020 = vpop.f32.mrb[0].mxu0
        %1021 = vmatprep.mubr.f32.mxu0 0.0
        %1022 = vmatmul.mubr.f32.gmra.mrb[0].mxu0 %v561
        %v1023 = vpop.f32.mrb[0].mxu0
        %v1024 = vadd.f32 0.0, %v1023
        %v1025 = vpop.f32.mrb[0].mxu0
        %1026 = vmatprep.mubr.f32.mxu0 0.0
        %1027 = vmatmul.mubr.f32.gmra.mrb[0].mxu0 %v564
        %v1028 = vpop.f32.mrb[0].mxu0
        %v1029 = vadd.f32 0.0, %v1028
        %v1030 = vpop.f32.mrb[0].mxu0
        %1031 = vmatprep.mubr.f32.mxu0 0.0
        %1032 = vmatmul.mubr.f32.gmra.mrb[0].mxu0 %v567
        %v1033 = vpop.f32.mrb[0].mxu0
        %v1034 = vadd.f32 0.0, %v1033
        %v1035 = vpop.f32.mrb[0].mxu0
        %1036 = vmatprep.mubr.f32.mxu0 0.0
        %1037 = vmatmul.mubr.f32.gmra.mrb[0].mxu0 %v570
        %v1038 = vpop.f32.mrb[0].mxu0
        %v1039 = vadd.f32 0.0, %v1038
        %v1040 = vpop.f32.mrb[0].mxu0
        %1041 = vmatprep.mubr.f32.mxu0 0.0
        %1042 = vmatmul.mubr.f32.gmra.mrb[0].mxu0 %v573
        %v1043 = vpop.f32.mrb[0].mxu0
        %v1044 = vadd.f32 0.0, %v1043
        %v1045 = vpop.f32.mrb[0].mxu0
        %1046 = vmatprep.mubr.f32.mxu0 0.0
        %1047 = vmatmul.mubr.f32.gmra.mrb[0].mxu0 %v576
        %v1048 = vpop.f32.mrb[0].mxu0
        %v1049 = vadd.f32 0.0, %v1048
        %v1050 = vpop.f32.mrb[0].mxu0
        %1051 = vmatprep.mubr.f32.mxu0 0.0
        %1052 = vmatmul.mubr.f32.gmra.mrb[0].mxu0 %v579
        %v1053 = vpop.f32.mrb[0].mxu0
        %v1054 = vadd.f32 0.0, %v1053
        %v1055 = vpop.f32.mrb[0].mxu0
        %1056 = vmatprep.mubr.f32.mxu0 0.0
        %1057 = vmatmul.mubr.f32.gmra.mrb[0].mxu0 %v582
        %v1058 = vpop.f32.mrb[0].mxu0
        %v1059 = vadd.f32 0.0, %v1058
        %v1060 = vpop.f32.mrb[0].mxu0
        %1061 = vmatprep.mubr.f32.mxu0 0.0
        %1062 = vmatmul.mubr.f32.gmra.mrb[0].mxu0 %v585
        %v1063 = vpop.f32.mrb[0].mxu0
        %v1064 = vadd.f32 0.0, %v1063
        %v1065 = vpop.f32.mrb[0].mxu0
        %1066 = vmatprep.mubr.f32.mxu0 0.0
        %1067 = vmatmul.mubr.f32.gmra.mrb[0].mxu0 %v588
        %v1068 = vpop.f32.mrb[0].mxu0
        %v1069 = vadd.f32 0.0, %v1068
        %v1070 = vpop.f32.mrb[0].mxu0
        %1071 = vdwg.mxu0
        %v1072 = vlaneseq
        %v1073 = vshrl.u32 %v1072, 7
        %v1074 = vsub.s32 2, %v1073
        %v1075 = vrot.slane %v247, %v1074
        %vm1076 = vcmp.eq.s32.totalorder %v297, %v1075
        %vm1077 = vcmp.eq.s32.totalorder %v298, %v1075
        %v1078 = vsel %vm1076, 1, 0
        %v1079 = vsel %vm1077, 1, 0
        %v1080 = vcvt.s32.f32 %v1078
        %v1081 = vcvt.s32.f32 %v1079
        %1082 = vmatprep.subr.mxu0 0.0
        %1083 = vmatpush1.msra.mxu0 %v1080
        %1084 = vmatprep.subr.mxu0 0.0
        %1085 = vmatpush1.msra.mxu0 %v1081
        %1086 = vmatprep.subr.mxu0 0.0
        %1087 = vmatpush1.msra.mxu0 0.0
        %1088 = vmatprep.subr.mxu0 0.0
        %1089 = vmatpush1.msra.mxu0 0.0
        %1090 = vmatprep.subr.mxu0 0.0
        %1091 = vmatpush1.msra.mxu0 0.0
        %1092 = vmatprep.subr.mxu0 0.0
        %1093 = vmatpush1.msra.mxu0 0.0
        %1094 = vmatprep.subr.mxu0 0.0
        %1095 = vmatpush1.msra.mxu0 0.0
        %1096 = vmatprep.subr.mxu0 0.0
        %1097 = vmatpush1.msra.mxu0 0.0
        %1098 = vmatprep.subr.mxu0 0.0
        %1099 = vmatpush1.msra.mxu0 0.0
        %1100 = vmatprep.subr.mxu0 0.0
        %1101 = vmatpush1.msra.mxu0 0.0
        %1102 = vmatprep.subr.mxu0 0.0
        %1103 = vmatpush1.msra.mxu0 0.0
        %1104 = vmatprep.subr.mxu0 0.0
        %1105 = vmatpush1.msra.mxu0 0.0
        %1106 = vmatprep.subr.mxu0 0.0
        %1107 = vmatpush1.msra.mxu0 0.0
        %1108 = vmatprep.subr.mxu0 0.0
        %1109 = vmatpush1.msra.mxu0 0.0
        %1110 = vmatprep.subr.mxu0 0.0
        %1111 = vmatpush1.msra.mxu0 0.0
        %1112 = vmatprep.subr.mxu0 0.0
        %1113 = vmatpush1.msra.mxu0 0.0
        %1114 = vmatprep.subr.mxu0 0.0
        %1115 = vmatpush1.msra.mxu0 0.0
        %1116 = vmatprep.subr.mxu0 0.0
        %1117 = vmatpush1.msra.mxu0 0.0
        %1118 = vmatprep.subr.mxu0 0.0
        %1119 = vmatpush1.msra.mxu0 0.0
        %1120 = vmatprep.subr.mxu0 0.0
        %1121 = vmatpush1.msra.mxu0 0.0
        %1122 = vmatprep.subr.mxu0 0.0
        %1123 = vmatpush1.msra.mxu0 0.0
        %1124 = vmatprep.subr.mxu0 0.0
        %1125 = vmatpush1.msra.mxu0 0.0
        %1126 = vmatprep.subr.mxu0 0.0
        %1127 = vmatpush1.msra.mxu0 0.0
        %1128 = vmatprep.subr.mxu0 0.0
        %1129 = vmatpush1.msra.mxu0 0.0
        %1130 = vmatprep.subr.mxu0 0.0
        %1131 = vmatpush1.msra.mxu0 0.0
        %1132 = vmatprep.subr.mxu0 0.0
        %1133 = vmatpush1.msra.mxu0 0.0
        %1134 = vmatprep.subr.mxu0 0.0
        %1135 = vmatpush1.msra.mxu0 0.0
        %1136 = vmatprep.subr.mxu0 0.0
        %1137 = vmatpush1.msra.mxu0 0.0
        %1138 = vmatprep.subr.mxu0 0.0
        %1139 = vmatpush1.msra.mxu0 0.0
        %1140 = vmatprep.subr.mxu0 0.0
        %1141 = vmatpush1.msra.mxu0 0.0
        %1142 = vmatprep.subr.mxu0 0.0
        %1143 = vmatpush1.msra.mxu0 0.0
        %1144 = vmatprep.subr.mxu0 0.0
        %1145 = vmatpush1.msra.mxu0 0.0
        %1146 = vmatprep.mubr.f32.mxu0 0.0
        %1147 = vmatmul.mubr.f32.gmra.mrb[0].mxu0 %v325
        %v1148 = vpop.f32.mrb[0].mxu0
        %v1149 = vadd.f32 0.0, %v1148
        %v1150 = vpop.f32.mrb[0].mxu0
        %1151 = vmatprep.mubr.f32.mxu0 0.0
        %1152 = vmatmul.mubr.f32.gmra.mrb[0].mxu0 %v328
        %v1153 = vpop.f32.mrb[0].mxu0
        %v1154 = vadd.f32 0.0, %v1153
        %v1155 = vpop.f32.mrb[0].mxu0
        %1156 = vmatprep.mubr.f32.mxu0 0.0
        %1157 = vmatmul.mubr.f32.gmra.mrb[0].mxu0 %v331
        %v1158 = vpop.f32.mrb[0].mxu0
        %v1159 = vadd.f32 0.0, %v1158
        %v1160 = vpop.f32.mrb[0].mxu0
        %1161 = vmatprep.mubr.f32.mxu0 0.0
        %1162 = vmatmul.mubr.f32.gmra.mrb[0].mxu0 %v334
        %v1163 = vpop.f32.mrb[0].mxu0
        %v1164 = vadd.f32 0.0, %v1163
        %v1165 = vpop.f32.mrb[0].mxu0
        %1166 = vmatprep.mubr.f32.mxu0 0.0
        %1167 = vmatmul.mubr.f32.gmra.mrb[0].mxu0 %v337
        %v1168 = vpop.f32.mrb[0].mxu0
        %v1169 = vadd.f32 0.0, %v1168
        %v1170 = vpop.f32.mrb[0].mxu0
        %1171 = vmatprep.mubr.f32.mxu0 0.0
        %1172 = vmatmul.mubr.f32.gmra.mrb[0].mxu0 %v340
        %v1173 = vpop.f32.mrb[0].mxu0
        %v1174 = vadd.f32 0.0, %v1173
        %v1175 = vpop.f32.mrb[0].mxu0
        %1176 = vmatprep.mubr.f32.mxu0 0.0
        %1177 = vmatmul.mubr.f32.gmra.mrb[0].mxu0 %v343
        %v1178 = vpop.f32.mrb[0].mxu0
        %v1179 = vadd.f32 0.0, %v1178
        %v1180 = vpop.f32.mrb[0].mxu0
        %1181 = vmatprep.mubr.f32.mxu0 0.0
        %1182 = vmatmul.mubr.f32.gmra.mrb[0].mxu0 %v346
        %v1183 = vpop.f32.mrb[0].mxu0
        %v1184 = vadd.f32 0.0, %v1183
        %v1185 = vpop.f32.mrb[0].mxu0
        %1186 = vmatprep.mubr.f32.mxu0 0.0
        %1187 = vmatmul.mubr.f32.gmra.mrb[0].mxu0 %v349
        %v1188 = vpop.f32.mrb[0].mxu0
        %v1189 = vadd.f32 0.0, %v1188
        %v1190 = vpop.f32.mrb[0].mxu0
        %1191 = vmatprep.mubr.f32.mxu0 0.0
        %1192 = vmatmul.mubr.f32.gmra.mrb[0].mxu0 %v352
        %v1193 = vpop.f32.mrb[0].mxu0
        %v1194 = vadd.f32 0.0, %v1193
        %v1195 = vpop.f32.mrb[0].mxu0
        %1196 = vmatprep.mubr.f32.mxu0 0.0
        %1197 = vmatmul.mubr.f32.gmra.mrb[0].mxu0 %v355
        %v1198 = vpop.f32.mrb[0].mxu0
        %v1199 = vadd.f32 0.0, %v1198
        %v1200 = vpop.f32.mrb[0].mxu0
        %1201 = vmatprep.mubr.f32.mxu0 0.0
        %1202 = vmatmul.mubr.f32.gmra.mrb[0].mxu0 %v358
        %v1203 = vpop.f32.mrb[0].mxu0
        %v1204 = vadd.f32 0.0, %v1203
        %v1205 = vpop.f32.mrb[0].mxu0
        %1206 = vdwg.mxu0
        %v1207 = vadd.f32 %v1149, %v1014
        %v1208 = vadd.f32 %v1154, %v1019
        %v1209 = vadd.f32 %v1159, %v1024
        %v1210 = vadd.f32 %v1164, %v1029
        %v1211 = vadd.f32 %v1169, %v1034
        %v1212 = vadd.f32 %v1174, %v1039
        %v1213 = vadd.f32 %v1179, %v1044
        %v1214 = vadd.f32 %v1184, %v1049
        %v1215 = vxor.u32 %v1207, 2147483648
        %v1216 = vxor.u32 %v1208, 2147483648
        %v1217 = vxor.u32 %v1209, 2147483648
        %v1218 = vxor.u32 %v1210, 2147483648
        %v1219 = vxor.u32 %v1211, 2147483648
        %v1220 = vxor.u32 %v1212, 2147483648
        %v1221 = vxor.u32 %v1213, 2147483648
        %v1222 = vxor.u32 %v1214, 2147483648
        %v1223 = vmul.f32 %v1215, 1.442695
        %v1224 = vpow.pop %v1223
        %v1225 = vmul.f32 %v1216, 1.442695
        %v1226 = vpow.pop %v1225
        %v1227 = vmul.f32 %v1217, 1.442695
        %v1228 = vpow.pop %v1227
        %v1229 = vmul.f32 %v1218, 1.442695
        %v1230 = vpow.pop %v1229
        %v1231 = vmul.f32 %v1219, 1.442695
        %v1232 = vpow.pop %v1231
        %v1233 = vmul.f32 %v1220, 1.442695
        %v1234 = vpow.pop %v1233
        %v1235 = vmul.f32 %v1221, 1.442695
        %v1236 = vpow.pop %v1235
        %v1237 = vmul.f32 %v1222, 1.442695
        %v1238 = vpow.pop %v1237
        %v1239 = vadd.f32 %v1224, 1.0
        %v1240 = vadd.f32 %v1226, 1.0
        %v1241 = vadd.f32 %v1228, 1.0
        %v1242 = vadd.f32 %v1230, 1.0
        %v1243 = vadd.f32 %v1232, 1.0
        %v1244 = vadd.f32 %v1234, 1.0
        %v1245 = vadd.f32 %v1236, 1.0
        %v1246 = vadd.f32 %v1238, 1.0
        %v1247 = vrcp.pop %v1239
        %v1248 = vmul.f32 1.0, %v1247
        %v1249 = vrcp.pop %v1240
        %v1250 = vmul.f32 1.0, %v1249
        %v1251 = vrcp.pop %v1241
        %v1252 = vmul.f32 1.0, %v1251
        %v1253 = vrcp.pop %v1242
        %v1254 = vmul.f32 1.0, %v1253
        %v1255 = vrcp.pop %v1243
        %v1256 = vmul.f32 1.0, %v1255
        %v1257 = vrcp.pop %v1244
        %v1258 = vmul.f32 1.0, %v1257
        %v1259 = vrcp.pop %v1245
        %v1260 = vmul.f32 1.0, %v1259
        %v1261 = vrcp.pop %v1246
        %v1262 = vmul.f32 1.0, %v1261
        %v1263 = vadd.f32 %v1054, %v279
        %v1264 = vadd.f32 %v1059, %v284
        %v1265 = vadd.f32 %v1064, %v289
        %v1266 = vadd.f32 %v1069, %v294
        %v1267 = vmul.f32 %v1248, %v1263
        %v1268 = vmul.f32 %v1250, %v1264
        %v1269 = vmul.f32 %v1252, %v1265
        %v1270 = vmul.f32 %v1254, %v1266
        %v1271 = vadd.f32 %v1189, %v1267
        %v1272 = vadd.f32 %v1194, %v1268
        %v1273 = vadd.f32 %v1199, %v1269
        %v1274 = vadd.f32 %v1204, %v1270
        %v1275 = vtanh.pop %v1271
        %v1276 = vtanh.pop %v1272
        %v1277 = vtanh.pop %v1273
        %v1278 = vtanh.pop %v1274
        %v1279 = vsub.f32 1.0, %v1256
        %v1280 = vsub.f32 1.0, %v1258
        %v1281 = vsub.f32 1.0, %v1260
        %v1282 = vsub.f32 1.0, %v1262
        %v1283 = vmul.f32 %v1279, %v1275
        %v1284 = vmul.f32 %v1280, %v1276
        %v1285 = vmul.f32 %v1281, %v1277
        %v1286 = vmul.f32 %v1282, %v1278
        %v1287 = vmul.f32 %v1256, %v943
        %v1288 = vmul.f32 %v1258, %v944
        %v1289 = vmul.f32 %v1260, %v945
        %v1290 = vmul.f32 %v1262, %v946
        %v1291 = vadd.f32 %v1283, %v1287
        %v1292 = vadd.f32 %v1284, %v1288
        %v1293 = vadd.f32 %v1285, %v1289
        %v1294 = vadd.f32 %v1286, %v1290
        %v1295 = vsel %vm303, 1, 0
        %v1296 = vlaneseq
        %v1297 = vshrl.u32 %v1296, 7
        %v1298 = vsub.s32 0, %v1297
        %v1299 = vrot.slane %v1295, %v1298
        %vm1300 = vcmp.eq.s32.totalorder %v1299, 1
        %v1301 = vsel %vm1300, %v1291, %v943
        %v1302 = vsel %vm1300, %v1292, %v944
        %v1303 = vsel %vm1300, %v1293, %v945
        %v1304 = vsel %vm1300, %v1294, %v946
        %1305 = vmatprep.subr.mxu0 0.0
        %1306 = vmatpush1.msra.mxu0 %v1301
        %1307 = vmatprep.subr.mxu0 0.0
        %1308 = vmatpush1.msra.mxu0 %v1302
        %1309 = vmatprep.subr.mxu0 0.0
        %1310 = vmatpush1.msra.mxu0 %v1303
        %1311 = vmatprep.subr.mxu0 0.0
        %1312 = vmatpush1.msra.mxu0 %v1304
        %1313 = vmatprep.subr.mxu0 0.0
        %1314 = vmatpush1.msra.mxu0 0.0
        %1315 = vmatprep.subr.mxu0 0.0
        %1316 = vmatpush1.msra.mxu0 0.0
        %1317 = vmatprep.subr.mxu0 0.0
        %1318 = vmatpush1.msra.mxu0 0.0
        %1319 = vmatprep.subr.mxu0 0.0
        %1320 = vmatpush1.msra.mxu0 0.0
        %1321 = vmatprep.subr.mxu0 0.0
        %1322 = vmatpush1.msra.mxu0 0.0
        %1323 = vmatprep.subr.mxu0 0.0
        %1324 = vmatpush1.msra.mxu0 0.0
        %1325 = vmatprep.subr.mxu0 0.0
        %1326 = vmatpush1.msra.mxu0 0.0
        %1327 = vmatprep.subr.mxu0 0.0
        %1328 = vmatpush1.msra.mxu0 0.0
        %1329 = vmatprep.subr.mxu0 0.0
        %1330 = vmatpush1.msra.mxu0 0.0
        %1331 = vmatprep.subr.mxu0 0.0
        %1332 = vmatpush1.msra.mxu0 0.0
        %1333 = vmatprep.subr.mxu0 0.0
        %1334 = vmatpush1.msra.mxu0 0.0
        %1335 = vmatprep.subr.mxu0 0.0
        %1336 = vmatpush1.msra.mxu0 0.0
        %1337 = vmatprep.subr.mxu0 0.0
        %1338 = vmatpush1.msra.mxu0 0.0
        %1339 = vmatprep.subr.mxu0 0.0
        %1340 = vmatpush1.msra.mxu0 0.0
        %1341 = vmatprep.subr.mxu0 0.0
        %1342 = vmatpush1.msra.mxu0 0.0
        %1343 = vmatprep.subr.mxu0 0.0
        %1344 = vmatpush1.msra.mxu0 0.0
        %1345 = vmatprep.subr.mxu0 0.0
        %1346 = vmatpush1.msra.mxu0 0.0
        %1347 = vmatprep.subr.mxu0 0.0
        %1348 = vmatpush1.msra.mxu0 0.0
        %1349 = vmatprep.subr.mxu0 0.0
        %1350 = vmatpush1.msra.mxu0 0.0
        %1351 = vmatprep.subr.mxu0 0.0
        %1352 = vmatpush1.msra.mxu0 0.0
        %1353 = vmatprep.subr.mxu0 0.0
        %1354 = vmatpush1.msra.mxu0 0.0
        %1355 = vmatprep.subr.mxu0 0.0
        %1356 = vmatpush1.msra.mxu0 0.0
        %1357 = vmatprep.subr.mxu0 0.0
        %1358 = vmatpush1.msra.mxu0 0.0
        %1359 = vmatprep.subr.mxu0 0.0
        %1360 = vmatpush1.msra.mxu0 0.0
        %1361 = vmatprep.subr.mxu0 0.0
        %1362 = vmatpush1.msra.mxu0 0.0
        %1363 = vmatprep.subr.mxu0 0.0
        %1364 = vmatpush1.msra.mxu0 0.0
        %1365 = vmatprep.subr.mxu0 0.0
        %1366 = vmatpush1.msra.mxu0 0.0
        %1367 = vmatprep.subr.mxu0 0.0
        %1368 = vmatpush1.msra.mxu0 0.0
        %1369 = vmatprep.mubr.f32.mxu0 0.0
        %1370 = vmatmul.mubr.f32.gmra.mrb[0].mxu0 %v555
        %v1371 = vpop.f32.mrb[0].mxu0
        %v1372 = vadd.f32 0.0, %v1371
        %v1373 = vpop.f32.mrb[0].mxu0
        %1374 = vmatprep.mubr.f32.mxu0 0.0
        %1375 = vmatmul.mubr.f32.gmra.mrb[0].mxu0 %v558
        %v1376 = vpop.f32.mrb[0].mxu0
        %v1377 = vadd.f32 0.0, %v1376
        %v1378 = vpop.f32.mrb[0].mxu0
        %1379 = vmatprep.mubr.f32.mxu0 0.0
        %1380 = vmatmul.mubr.f32.gmra.mrb[0].mxu0 %v561
        %v1381 = vpop.f32.mrb[0].mxu0
        %v1382 = vadd.f32 0.0, %v1381
        %v1383 = vpop.f32.mrb[0].mxu0
        %1384 = vmatprep.mubr.f32.mxu0 0.0
        %1385 = vmatmul.mubr.f32.gmra.mrb[0].mxu0 %v564
        %v1386 = vpop.f32.mrb[0].mxu0
        %v1387 = vadd.f32 0.0, %v1386
        %v1388 = vpop.f32.mrb[0].mxu0
        %1389 = vmatprep.mubr.f32.mxu0 0.0
        %1390 = vmatmul.mubr.f32.gmra.mrb[0].mxu0 %v567
        %v1391 = vpop.f32.mrb[0].mxu0
        %v1392 = vadd.f32 0.0, %v1391
        %v1393 = vpop.f32.mrb[0].mxu0
        %1394 = vmatprep.mubr.f32.mxu0 0.0
        %1395 = vmatmul.mubr.f32.gmra.mrb[0].mxu0 %v570
        %v1396 = vpop.f32.mrb[0].mxu0
        %v1397 = vadd.f32 0.0, %v1396
        %v1398 = vpop.f32.mrb[0].mxu0
        %1399 = vmatprep.mubr.f32.mxu0 0.0
        %1400 = vmatmul.mubr.f32.gmra.mrb[0].mxu0 %v573
        %v1401 = vpop.f32.mrb[0].mxu0
        %v1402 = vadd.f32 0.0, %v1401
        %v1403 = vpop.f32.mrb[0].mxu0
        %1404 = vmatprep.mubr.f32.mxu0 0.0
        %1405 = vmatmul.mubr.f32.gmra.mrb[0].mxu0 %v576
        %v1406 = vpop.f32.mrb[0].mxu0
        %v1407 = vadd.f32 0.0, %v1406
        %v1408 = vpop.f32.mrb[0].mxu0
        %1409 = vmatprep.mubr.f32.mxu0 0.0
        %1410 = vmatmul.mubr.f32.gmra.mrb[0].mxu0 %v579
        %v1411 = vpop.f32.mrb[0].mxu0
        %v1412 = vadd.f32 0.0, %v1411
        %v1413 = vpop.f32.mrb[0].mxu0
        %1414 = vmatprep.mubr.f32.mxu0 0.0
        %1415 = vmatmul.mubr.f32.gmra.mrb[0].mxu0 %v582
        %v1416 = vpop.f32.mrb[0].mxu0
        %v1417 = vadd.f32 0.0, %v1416
        %v1418 = vpop.f32.mrb[0].mxu0
        %1419 = vmatprep.mubr.f32.mxu0 0.0
        %1420 = vmatmul.mubr.f32.gmra.mrb[0].mxu0 %v585
        %v1421 = vpop.f32.mrb[0].mxu0
        %v1422 = vadd.f32 0.0, %v1421
        %v1423 = vpop.f32.mrb[0].mxu0
        %1424 = vmatprep.mubr.f32.mxu0 0.0
        %1425 = vmatmul.mubr.f32.gmra.mrb[0].mxu0 %v588
        %v1426 = vpop.f32.mrb[0].mxu0
        %v1427 = vadd.f32 0.0, %v1426
        %v1428 = vpop.f32.mrb[0].mxu0
        %1429 = vdwg.mxu0
        %v1430 = vlaneseq
        %v1431 = vshrl.u32 %v1430, 7
        %v1432 = vsub.s32 3, %v1431
        %v1433 = vrot.slane %v247, %v1432
        %vm1434 = vcmp.eq.s32.totalorder %v297, %v1433
        %vm1435 = vcmp.eq.s32.totalorder %v298, %v1433
        %v1436 = vsel %vm1434, 1, 0
        %v1437 = vsel %vm1435, 1, 0
        %v1438 = vcvt.s32.f32 %v1436
        %v1439 = vcvt.s32.f32 %v1437
        %1440 = vmatprep.subr.mxu0 0.0
        %1441 = vmatpush1.msra.mxu0 %v1438
        %1442 = vmatprep.subr.mxu0 0.0
        %1443 = vmatpush1.msra.mxu0 %v1439
        %1444 = vmatprep.subr.mxu0 0.0
        %1445 = vmatpush1.msra.mxu0 0.0
        %1446 = vmatprep.subr.mxu0 0.0
        %1447 = vmatpush1.msra.mxu0 0.0
        %1448 = vmatprep.subr.mxu0 0.0
        %1449 = vmatpush1.msra.mxu0 0.0
        %1450 = vmatprep.subr.mxu0 0.0
        %1451 = vmatpush1.msra.mxu0 0.0
        %1452 = vmatprep.subr.mxu0 0.0
        %1453 = vmatpush1.msra.mxu0 0.0
        %1454 = vmatprep.subr.mxu0 0.0
        %1455 = vmatpush1.msra.mxu0 0.0
        %1456 = vmatprep.subr.mxu0 0.0
        %1457 = vmatpush1.msra.mxu0 0.0
        %1458 = vmatprep.subr.mxu0 0.0
        %1459 = vmatpush1.msra.mxu0 0.0
        %1460 = vmatprep.subr.mxu0 0.0
        %1461 = vmatpush1.msra.mxu0 0.0
        %1462 = vmatprep.subr.mxu0 0.0
        %1463 = vmatpush1.msra.mxu0 0.0
        %1464 = vmatprep.subr.mxu0 0.0
        %1465 = vmatpush1.msra.mxu0 0.0
        %1466 = vmatprep.subr.mxu0 0.0
        %1467 = vmatpush1.msra.mxu0 0.0
        %1468 = vmatprep.subr.mxu0 0.0
        %1469 = vmatpush1.msra.mxu0 0.0
        %1470 = vmatprep.subr.mxu0 0.0
        %1471 = vmatpush1.msra.mxu0 0.0
        %1472 = vmatprep.subr.mxu0 0.0
        %1473 = vmatpush1.msra.mxu0 0.0
        %1474 = vmatprep.subr.mxu0 0.0
        %1475 = vmatpush1.msra.mxu0 0.0
        %1476 = vmatprep.subr.mxu0 0.0
        %1477 = vmatpush1.msra.mxu0 0.0
        %1478 = vmatprep.subr.mxu0 0.0
        %1479 = vmatpush1.msra.mxu0 0.0
        %1480 = vmatprep.subr.mxu0 0.0
        %1481 = vmatpush1.msra.mxu0 0.0
        %1482 = vmatprep.subr.mxu0 0.0
        %1483 = vmatpush1.msra.mxu0 0.0
        %1484 = vmatprep.subr.mxu0 0.0
        %1485 = vmatpush1.msra.mxu0 0.0
        %1486 = vmatprep.subr.mxu0 0.0
        %1487 = vmatpush1.msra.mxu0 0.0
        %1488 = vmatprep.subr.mxu0 0.0
        %1489 = vmatpush1.msra.mxu0 0.0
        %1490 = vmatprep.subr.mxu0 0.0
        %1491 = vmatpush1.msra.mxu0 0.0
        %1492 = vmatprep.subr.mxu0 0.0
        %1493 = vmatpush1.msra.mxu0 0.0
        %1494 = vmatprep.subr.mxu0 0.0
        %1495 = vmatpush1.msra.mxu0 0.0
        %1496 = vmatprep.subr.mxu0 0.0
        %1497 = vmatpush1.msra.mxu0 0.0
        %1498 = vmatprep.subr.mxu0 0.0
        %1499 = vmatpush1.msra.mxu0 0.0
        %1500 = vmatprep.subr.mxu0 0.0
        %1501 = vmatpush1.msra.mxu0 0.0
        %1502 = vmatprep.subr.mxu0 0.0
        %1503 = vmatpush1.msra.mxu0 0.0
        %1504 = vmatprep.mubr.f32.mxu0 0.0
        %1505 = vmatmul.mubr.f32.gmra.mrb[0].mxu0 %v325
        %v1506 = vpop.f32.mrb[0].mxu0
        %v1507 = vadd.f32 0.0, %v1506
        %v1508 = vpop.f32.mrb[0].mxu0
        %1509 = vmatprep.mubr.f32.mxu0 0.0
        %1510 = vmatmul.mubr.f32.gmra.mrb[0].mxu0 %v328
        %v1511 = vpop.f32.mrb[0].mxu0
        %v1512 = vadd.f32 0.0, %v1511
        %v1513 = vpop.f32.mrb[0].mxu0
        %1514 = vmatprep.mubr.f32.mxu0 0.0
        %1515 = vmatmul.mubr.f32.gmra.mrb[0].mxu0 %v331
        %v1516 = vpop.f32.mrb[0].mxu0
        %v1517 = vadd.f32 0.0, %v1516
        %v1518 = vpop.f32.mrb[0].mxu0
        %1519 = vmatprep.mubr.f32.mxu0 0.0
        %1520 = vmatmul.mubr.f32.gmra.mrb[0].mxu0 %v334
        %v1521 = vpop.f32.mrb[0].mxu0
        %v1522 = vadd.f32 0.0, %v1521
        %v1523 = vpop.f32.mrb[0].mxu0
        %1524 = vmatprep.mubr.f32.mxu0 0.0
        %1525 = vmatmul.mubr.f32.gmra.mrb[0].mxu0 %v337
        %v1526 = vpop.f32.mrb[0].mxu0
        %v1527 = vadd.f32 0.0, %v1526
        %v1528 = vpop.f32.mrb[0].mxu0
        %1529 = vmatprep.mubr.f32.mxu0 0.0
        %1530 = vmatmul.mubr.f32.gmra.mrb[0].mxu0 %v340
        %v1531 = vpop.f32.mrb[0].mxu0
        %v1532 = vadd.f32 0.0, %v1531
        %v1533 = vpop.f32.mrb[0].mxu0
        %1534 = vmatprep.mubr.f32.mxu0 0.0
        %1535 = vmatmul.mubr.f32.gmra.mrb[0].mxu0 %v343
        %v1536 = vpop.f32.mrb[0].mxu0
        %v1537 = vadd.f32 0.0, %v1536
        %v1538 = vpop.f32.mrb[0].mxu0
        %1539 = vmatprep.mubr.f32.mxu0 0.0
        %1540 = vmatmul.mubr.f32.gmra.mrb[0].mxu0 %v346
        %v1541 = vpop.f32.mrb[0].mxu0
        %v1542 = vadd.f32 0.0, %v1541
        %v1543 = vpop.f32.mrb[0].mxu0
        %1544 = vmatprep.mubr.f32.mxu0 0.0
        %1545 = vmatmul.mubr.f32.gmra.mrb[0].mxu0 %v349
        %v1546 = vpop.f32.mrb[0].mxu0
        %v1547 = vadd.f32 0.0, %v1546
        %v1548 = vpop.f32.mrb[0].mxu0
        %1549 = vmatprep.mubr.f32.mxu0 0.0
        %1550 = vmatmul.mubr.f32.gmra.mrb[0].mxu0 %v352
        %v1551 = vpop.f32.mrb[0].mxu0
        %v1552 = vadd.f32 0.0, %v1551
        %v1553 = vpop.f32.mrb[0].mxu0
        %1554 = vmatprep.mubr.f32.mxu0 0.0
        %1555 = vmatmul.mubr.f32.gmra.mrb[0].mxu0 %v355
        %v1556 = vpop.f32.mrb[0].mxu0
        %v1557 = vadd.f32 0.0, %v1556
        %v1558 = vpop.f32.mrb[0].mxu0
        %1559 = vmatprep.mubr.f32.mxu0 0.0
        %1560 = vmatmul.mubr.f32.gmra.mrb[0].mxu0 %v358
        %v1561 = vpop.f32.mrb[0].mxu0
        %v1562 = vadd.f32 0.0, %v1561
        %v1563 = vpop.f32.mrb[0].mxu0
        %1564 = vdwg.mxu0
        %v1565 = vadd.f32 %v1507, %v1372
        %v1566 = vadd.f32 %v1512, %v1377
        %v1567 = vadd.f32 %v1517, %v1382
        %v1568 = vadd.f32 %v1522, %v1387
        %v1569 = vadd.f32 %v1527, %v1392
        %v1570 = vadd.f32 %v1532, %v1397
        %v1571 = vadd.f32 %v1537, %v1402
        %v1572 = vadd.f32 %v1542, %v1407
        %v1573 = vxor.u32 %v1565, 2147483648
        %v1574 = vxor.u32 %v1566, 2147483648
        %v1575 = vxor.u32 %v1567, 2147483648
        %v1576 = vxor.u32 %v1568, 2147483648
        %v1577 = vxor.u32 %v1569, 2147483648
        %v1578 = vxor.u32 %v1570, 2147483648
        %v1579 = vxor.u32 %v1571, 2147483648
        %v1580 = vxor.u32 %v1572, 2147483648
        %v1581 = vmul.f32 %v1573, 1.442695
        %v1582 = vpow.pop %v1581
        %v1583 = vmul.f32 %v1574, 1.442695
        %v1584 = vpow.pop %v1583
        %v1585 = vmul.f32 %v1575, 1.442695
        %v1586 = vpow.pop %v1585
        %v1587 = vmul.f32 %v1576, 1.442695
        %v1588 = vpow.pop %v1587
        %v1589 = vmul.f32 %v1577, 1.442695
        %v1590 = vpow.pop %v1589
        %v1591 = vmul.f32 %v1578, 1.442695
        %v1592 = vpow.pop %v1591
        %v1593 = vmul.f32 %v1579, 1.442695
        %v1594 = vpow.pop %v1593
        %v1595 = vmul.f32 %v1580, 1.442695
        %v1596 = vpow.pop %v1595
        %v1597 = vadd.f32 %v1582, 1.0
        %v1598 = vadd.f32 %v1584, 1.0
        %v1599 = vadd.f32 %v1586, 1.0
        %v1600 = vadd.f32 %v1588, 1.0
        %v1601 = vadd.f32 %v1590, 1.0
        %v1602 = vadd.f32 %v1592, 1.0
        %v1603 = vadd.f32 %v1594, 1.0
        %v1604 = vadd.f32 %v1596, 1.0
        %v1605 = vrcp.pop %v1597
        %v1606 = vmul.f32 1.0, %v1605
        %v1607 = vrcp.pop %v1598
        %v1608 = vmul.f32 1.0, %v1607
        %v1609 = vrcp.pop %v1599
        %v1610 = vmul.f32 1.0, %v1609
        %v1611 = vrcp.pop %v1600
        %v1612 = vmul.f32 1.0, %v1611
        %v1613 = vrcp.pop %v1601
        %v1614 = vmul.f32 1.0, %v1613
        %v1615 = vrcp.pop %v1602
        %v1616 = vmul.f32 1.0, %v1615
        %v1617 = vrcp.pop %v1603
        %v1618 = vmul.f32 1.0, %v1617
        %v1619 = vrcp.pop %v1604
        %v1620 = vmul.f32 1.0, %v1619
        %v1621 = vadd.f32 %v1412, %v279
        %v1622 = vadd.f32 %v1417, %v284
        %v1623 = vadd.f32 %v1422, %v289
        %v1624 = vadd.f32 %v1427, %v294
        %v1625 = vmul.f32 %v1606, %v1621
        %v1626 = vmul.f32 %v1608, %v1622
        %v1627 = vmul.f32 %v1610, %v1623
        %v1628 = vmul.f32 %v1612, %v1624
        %v1629 = vadd.f32 %v1547, %v1625
        %v1630 = vadd.f32 %v1552, %v1626
        %v1631 = vadd.f32 %v1557, %v1627
        %v1632 = vadd.f32 %v1562, %v1628
        %v1633 = vtanh.pop %v1629
        %v1634 = vtanh.pop %v1630
        %v1635 = vtanh.pop %v1631
        %v1636 = vtanh.pop %v1632
        %v1637 = vsub.f32 1.0, %v1614
        %v1638 = vsub.f32 1.0, %v1616
        %v1639 = vsub.f32 1.0, %v1618
        %v1640 = vsub.f32 1.0, %v1620
        %v1641 = vmul.f32 %v1637, %v1633
        %v1642 = vmul.f32 %v1638, %v1634
        %v1643 = vmul.f32 %v1639, %v1635
        %v1644 = vmul.f32 %v1640, %v1636
        %v1645 = vmul.f32 %v1614, %v1301
        %v1646 = vmul.f32 %v1616, %v1302
        %v1647 = vmul.f32 %v1618, %v1303
        %v1648 = vmul.f32 %v1620, %v1304
        %v1649 = vadd.f32 %v1641, %v1645
        %v1650 = vadd.f32 %v1642, %v1646
        %v1651 = vadd.f32 %v1643, %v1647
        %v1652 = vadd.f32 %v1644, %v1648
        %v1653 = vsel %vm306, 1, 0
        %v1654 = vlaneseq
        %v1655 = vshrl.u32 %v1654, 7
        %v1656 = vsub.s32 0, %v1655
        %v1657 = vrot.slane %v1653, %v1656
        %vm1658 = vcmp.eq.s32.totalorder %v1657, 1
        %v1659 = vsel %vm1658, %v1649, %v1301
        %v1660 = vsel %vm1658, %v1650, %v1302
        %v1661 = vsel %vm1658, %v1651, %v1303
        %v1662 = vsel %vm1658, %v1652, %v1304
        %1663 = vmatprep.subr.mxu0 0.0
        %1664 = vmatpush1.msra.mxu0 %v1659
        %1665 = vmatprep.subr.mxu0 0.0
        %1666 = vmatpush1.msra.mxu0 %v1660
        %1667 = vmatprep.subr.mxu0 0.0
        %1668 = vmatpush1.msra.mxu0 %v1661
        %1669 = vmatprep.subr.mxu0 0.0
        %1670 = vmatpush1.msra.mxu0 %v1662
        %1671 = vmatprep.subr.mxu0 0.0
        %1672 = vmatpush1.msra.mxu0 0.0
        %1673 = vmatprep.subr.mxu0 0.0
        %1674 = vmatpush1.msra.mxu0 0.0
        %1675 = vmatprep.subr.mxu0 0.0
        %1676 = vmatpush1.msra.mxu0 0.0
        %1677 = vmatprep.subr.mxu0 0.0
        %1678 = vmatpush1.msra.mxu0 0.0
        %1679 = vmatprep.subr.mxu0 0.0
        %1680 = vmatpush1.msra.mxu0 0.0
        %1681 = vmatprep.subr.mxu0 0.0
        %1682 = vmatpush1.msra.mxu0 0.0
        %1683 = vmatprep.subr.mxu0 0.0
        %1684 = vmatpush1.msra.mxu0 0.0
        %1685 = vmatprep.subr.mxu0 0.0
        %1686 = vmatpush1.msra.mxu0 0.0
        %1687 = vmatprep.subr.mxu0 0.0
        %1688 = vmatpush1.msra.mxu0 0.0
        %1689 = vmatprep.subr.mxu0 0.0
        %1690 = vmatpush1.msra.mxu0 0.0
        %1691 = vmatprep.subr.mxu0 0.0
        %1692 = vmatpush1.msra.mxu0 0.0
        %1693 = vmatprep.subr.mxu0 0.0
        %1694 = vmatpush1.msra.mxu0 0.0
        %1695 = vmatprep.subr.mxu0 0.0
        %1696 = vmatpush1.msra.mxu0 0.0
        %1697 = vmatprep.subr.mxu0 0.0
        %1698 = vmatpush1.msra.mxu0 0.0
        %1699 = vmatprep.subr.mxu0 0.0
        %1700 = vmatpush1.msra.mxu0 0.0
        %1701 = vmatprep.subr.mxu0 0.0
        %1702 = vmatpush1.msra.mxu0 0.0
        %1703 = vmatprep.subr.mxu0 0.0
        %1704 = vmatpush1.msra.mxu0 0.0
        %1705 = vmatprep.subr.mxu0 0.0
        %1706 = vmatpush1.msra.mxu0 0.0
        %1707 = vmatprep.subr.mxu0 0.0
        %1708 = vmatpush1.msra.mxu0 0.0
        %1709 = vmatprep.subr.mxu0 0.0
        %1710 = vmatpush1.msra.mxu0 0.0
        %1711 = vmatprep.subr.mxu0 0.0
        %1712 = vmatpush1.msra.mxu0 0.0
        %1713 = vmatprep.subr.mxu0 0.0
        %1714 = vmatpush1.msra.mxu0 0.0
        %1715 = vmatprep.subr.mxu0 0.0
        %1716 = vmatpush1.msra.mxu0 0.0
        %1717 = vmatprep.subr.mxu0 0.0
        %1718 = vmatpush1.msra.mxu0 0.0
        %1719 = vmatprep.subr.mxu0 0.0
        %1720 = vmatpush1.msra.mxu0 0.0
        %1721 = vmatprep.subr.mxu0 0.0
        %1722 = vmatpush1.msra.mxu0 0.0
        %1723 = vmatprep.subr.mxu0 0.0
        %1724 = vmatpush1.msra.mxu0 0.0
        %1725 = vmatprep.subr.mxu0 0.0
        %1726 = vmatpush1.msra.mxu0 0.0
        %1727 = vmatprep.mubr.f32.mxu0 0.0
        %1728 = vmatmul.mubr.f32.gmra.mrb[0].mxu0 %v555
        %v1729 = vpop.f32.mrb[0].mxu0
        %v1730 = vadd.f32 0.0, %v1729
        %v1731 = vpop.f32.mrb[0].mxu0
        %1732 = vmatprep.mubr.f32.mxu0 0.0
        %1733 = vmatmul.mubr.f32.gmra.mrb[0].mxu0 %v558
        %v1734 = vpop.f32.mrb[0].mxu0
        %v1735 = vadd.f32 0.0, %v1734
        %v1736 = vpop.f32.mrb[0].mxu0
        %1737 = vmatprep.mubr.f32.mxu0 0.0
        %1738 = vmatmul.mubr.f32.gmra.mrb[0].mxu0 %v561
        %v1739 = vpop.f32.mrb[0].mxu0
        %v1740 = vadd.f32 0.0, %v1739
        %v1741 = vpop.f32.mrb[0].mxu0
        %1742 = vmatprep.mubr.f32.mxu0 0.0
        %1743 = vmatmul.mubr.f32.gmra.mrb[0].mxu0 %v564
        %v1744 = vpop.f32.mrb[0].mxu0
        %v1745 = vadd.f32 0.0, %v1744
        %v1746 = vpop.f32.mrb[0].mxu0
        %1747 = vmatprep.mubr.f32.mxu0 0.0
        %1748 = vmatmul.mubr.f32.gmra.mrb[0].mxu0 %v567
        %v1749 = vpop.f32.mrb[0].mxu0
        %v1750 = vadd.f32 0.0, %v1749
        %v1751 = vpop.f32.mrb[0].mxu0
        %1752 = vmatprep.mubr.f32.mxu0 0.0
        %1753 = vmatmul.mubr.f32.gmra.mrb[0].mxu0 %v570
        %v1754 = vpop.f32.mrb[0].mxu0
        %v1755 = vadd.f32 0.0, %v1754
        %v1756 = vpop.f32.mrb[0].mxu0
        %1757 = vmatprep.mubr.f32.mxu0 0.0
        %1758 = vmatmul.mubr.f32.gmra.mrb[0].mxu0 %v573
        %v1759 = vpop.f32.mrb[0].mxu0
        %v1760 = vadd.f32 0.0, %v1759
        %v1761 = vpop.f32.mrb[0].mxu0
        %1762 = vmatprep.mubr.f32.mxu0 0.0
        %1763 = vmatmul.mubr.f32.gmra.mrb[0].mxu0 %v576
        %v1764 = vpop.f32.mrb[0].mxu0
        %v1765 = vadd.f32 0.0, %v1764
        %v1766 = vpop.f32.mrb[0].mxu0
        %1767 = vmatprep.mubr.f32.mxu0 0.0
        %1768 = vmatmul.mubr.f32.gmra.mrb[0].mxu0 %v579
        %v1769 = vpop.f32.mrb[0].mxu0
        %v1770 = vadd.f32 0.0, %v1769
        %v1771 = vpop.f32.mrb[0].mxu0
        %1772 = vmatprep.mubr.f32.mxu0 0.0
        %1773 = vmatmul.mubr.f32.gmra.mrb[0].mxu0 %v582
        %v1774 = vpop.f32.mrb[0].mxu0
        %v1775 = vadd.f32 0.0, %v1774
        %v1776 = vpop.f32.mrb[0].mxu0
        %1777 = vmatprep.mubr.f32.mxu0 0.0
        %1778 = vmatmul.mubr.f32.gmra.mrb[0].mxu0 %v585
        %v1779 = vpop.f32.mrb[0].mxu0
        %v1780 = vadd.f32 0.0, %v1779
        %v1781 = vpop.f32.mrb[0].mxu0
        %1782 = vmatprep.mubr.f32.mxu0 0.0
        %1783 = vmatmul.mubr.f32.gmra.mrb[0].mxu0 %v588
        %v1784 = vpop.f32.mrb[0].mxu0
        %v1785 = vadd.f32 0.0, %v1784
        %v1786 = vpop.f32.mrb[0].mxu0
        %1787 = vdwg.mxu0
        %v1788 = vlaneseq
        %v1789 = vshrl.u32 %v1788, 7
        %v1790 = vsub.s32 4, %v1789
        %v1791 = vrot.slane %v247, %v1790
        %vm1792 = vcmp.eq.s32.totalorder %v297, %v1791
        %vm1793 = vcmp.eq.s32.totalorder %v298, %v1791
        %v1794 = vsel %vm1792, 1, 0
        %v1795 = vsel %vm1793, 1, 0
        %v1796 = vcvt.s32.f32 %v1794
        %v1797 = vcvt.s32.f32 %v1795
        %1798 = vmatprep.subr.mxu0 0.0
        %1799 = vmatpush1.msra.mxu0 %v1796
        %1800 = vmatprep.subr.mxu0 0.0
        %1801 = vmatpush1.msra.mxu0 %v1797
        %1802 = vmatprep.subr.mxu0 0.0
        %1803 = vmatpush1.msra.mxu0 0.0
        %1804 = vmatprep.subr.mxu0 0.0
        %1805 = vmatpush1.msra.mxu0 0.0
        %1806 = vmatprep.subr.mxu0 0.0
        %1807 = vmatpush1.msra.mxu0 0.0
        %1808 = vmatprep.subr.mxu0 0.0
        %1809 = vmatpush1.msra.mxu0 0.0
        %1810 = vmatprep.subr.mxu0 0.0
        %1811 = vmatpush1.msra.mxu0 0.0
        %1812 = vmatprep.subr.mxu0 0.0
        %1813 = vmatpush1.msra.mxu0 0.0
        %1814 = vmatprep.subr.mxu0 0.0
        %1815 = vmatpush1.msra.mxu0 0.0
        %1816 = vmatprep.subr.mxu0 0.0
        %1817 = vmatpush1.msra.mxu0 0.0
        %1818 = vmatprep.subr.mxu0 0.0
        %1819 = vmatpush1.msra.mxu0 0.0
        %1820 = vmatprep.subr.mxu0 0.0
        %1821 = vmatpush1.msra.mxu0 0.0
        %1822 = vmatprep.subr.mxu0 0.0
        %1823 = vmatpush1.msra.mxu0 0.0
        %1824 = vmatprep.subr.mxu0 0.0
        %1825 = vmatpush1.msra.mxu0 0.0
        %1826 = vmatprep.subr.mxu0 0.0
        %1827 = vmatpush1.msra.mxu0 0.0
        %1828 = vmatprep.subr.mxu0 0.0
        %1829 = vmatpush1.msra.mxu0 0.0
        %1830 = vmatprep.subr.mxu0 0.0
        %1831 = vmatpush1.msra.mxu0 0.0
        %1832 = vmatprep.subr.mxu0 0.0
        %1833 = vmatpush1.msra.mxu0 0.0
        %1834 = vmatprep.subr.mxu0 0.0
        %1835 = vmatpush1.msra.mxu0 0.0
        %1836 = vmatprep.subr.mxu0 0.0
        %1837 = vmatpush1.msra.mxu0 0.0
        %1838 = vmatprep.subr.mxu0 0.0
        %1839 = vmatpush1.msra.mxu0 0.0
        %1840 = vmatprep.subr.mxu0 0.0
        %1841 = vmatpush1.msra.mxu0 0.0
        %1842 = vmatprep.subr.mxu0 0.0
        %1843 = vmatpush1.msra.mxu0 0.0
        %1844 = vmatprep.subr.mxu0 0.0
        %1845 = vmatpush1.msra.mxu0 0.0
        %1846 = vmatprep.subr.mxu0 0.0
        %1847 = vmatpush1.msra.mxu0 0.0
        %1848 = vmatprep.subr.mxu0 0.0
        %1849 = vmatpush1.msra.mxu0 0.0
        %1850 = vmatprep.subr.mxu0 0.0
        %1851 = vmatpush1.msra.mxu0 0.0
        %1852 = vmatprep.subr.mxu0 0.0
        %1853 = vmatpush1.msra.mxu0 0.0
        %1854 = vmatprep.subr.mxu0 0.0
        %1855 = vmatpush1.msra.mxu0 0.0
        %1856 = vmatprep.subr.mxu0 0.0
        %1857 = vmatpush1.msra.mxu0 0.0
        %1858 = vmatprep.subr.mxu0 0.0
        %1859 = vmatpush1.msra.mxu0 0.0
        %1860 = vmatprep.subr.mxu0 0.0
        %1861 = vmatpush1.msra.mxu0 0.0
        %1862 = vmatprep.mubr.f32.mxu0 0.0
        %1863 = vmatmul.mubr.f32.gmra.mrb[0].mxu0 %v325
        %v1864 = vpop.f32.mrb[0].mxu0
        %v1865 = vadd.f32 0.0, %v1864
        %v1866 = vpop.f32.mrb[0].mxu0
        %1867 = vmatprep.mubr.f32.mxu0 0.0
        %1868 = vmatmul.mubr.f32.gmra.mrb[0].mxu0 %v328
        %v1869 = vpop.f32.mrb[0].mxu0
        %v1870 = vadd.f32 0.0, %v1869
        %v1871 = vpop.f32.mrb[0].mxu0
        %1872 = vmatprep.mubr.f32.mxu0 0.0
        %1873 = vmatmul.mubr.f32.gmra.mrb[0].mxu0 %v331
        %v1874 = vpop.f32.mrb[0].mxu0
        %v1875 = vadd.f32 0.0, %v1874
        %v1876 = vpop.f32.mrb[0].mxu0
        %1877 = vmatprep.mubr.f32.mxu0 0.0
        %1878 = vmatmul.mubr.f32.gmra.mrb[0].mxu0 %v334
        %v1879 = vpop.f32.mrb[0].mxu0
        %v1880 = vadd.f32 0.0, %v1879
        %v1881 = vpop.f32.mrb[0].mxu0
        %1882 = vmatprep.mubr.f32.mxu0 0.0
        %1883 = vmatmul.mubr.f32.gmra.mrb[0].mxu0 %v337
        %v1884 = vpop.f32.mrb[0].mxu0
        %v1885 = vadd.f32 0.0, %v1884
        %v1886 = vpop.f32.mrb[0].mxu0
        %1887 = vmatprep.mubr.f32.mxu0 0.0
        %1888 = vmatmul.mubr.f32.gmra.mrb[0].mxu0 %v340
        %v1889 = vpop.f32.mrb[0].mxu0
        %v1890 = vadd.f32 0.0, %v1889
        %v1891 = vpop.f32.mrb[0].mxu0
        %1892 = vmatprep.mubr.f32.mxu0 0.0
        %1893 = vmatmul.mubr.f32.gmra.mrb[0].mxu0 %v343
        %v1894 = vpop.f32.mrb[0].mxu0
        %v1895 = vadd.f32 0.0, %v1894
        %v1896 = vpop.f32.mrb[0].mxu0
        %1897 = vmatprep.mubr.f32.mxu0 0.0
        %1898 = vmatmul.mubr.f32.gmra.mrb[0].mxu0 %v346
        %v1899 = vpop.f32.mrb[0].mxu0
        %v1900 = vadd.f32 0.0, %v1899
        %v1901 = vpop.f32.mrb[0].mxu0
        %1902 = vmatprep.mubr.f32.mxu0 0.0
        %1903 = vmatmul.mubr.f32.gmra.mrb[0].mxu0 %v349
        %v1904 = vpop.f32.mrb[0].mxu0
        %v1905 = vadd.f32 0.0, %v1904
        %v1906 = vpop.f32.mrb[0].mxu0
        %1907 = vmatprep.mubr.f32.mxu0 0.0
        %1908 = vmatmul.mubr.f32.gmra.mrb[0].mxu0 %v352
        %v1909 = vpop.f32.mrb[0].mxu0
        %v1910 = vadd.f32 0.0, %v1909
        %v1911 = vpop.f32.mrb[0].mxu0
        %1912 = vmatprep.mubr.f32.mxu0 0.0
        %1913 = vmatmul.mubr.f32.gmra.mrb[0].mxu0 %v355
        %v1914 = vpop.f32.mrb[0].mxu0
        %v1915 = vadd.f32 0.0, %v1914
        %v1916 = vpop.f32.mrb[0].mxu0
        %1917 = vmatprep.mubr.f32.mxu0 0.0
        %1918 = vmatmul.mubr.f32.gmra.mrb[0].mxu0 %v358
        %v1919 = vpop.f32.mrb[0].mxu0
        %v1920 = vadd.f32 0.0, %v1919
        %v1921 = vpop.f32.mrb[0].mxu0
        %1922 = vdwg.mxu0
        %v1923 = vadd.f32 %v1865, %v1730
        %v1924 = vadd.f32 %v1870, %v1735
        %v1925 = vadd.f32 %v1875, %v1740
        %v1926 = vadd.f32 %v1880, %v1745
        %v1927 = vadd.f32 %v1885, %v1750
        %v1928 = vadd.f32 %v1890, %v1755
        %v1929 = vadd.f32 %v1895, %v1760
        %v1930 = vadd.f32 %v1900, %v1765
        %v1931 = vxor.u32 %v1923, 2147483648
        %v1932 = vxor.u32 %v1924, 2147483648
        %v1933 = vxor.u32 %v1925, 2147483648
        %v1934 = vxor.u32 %v1926, 2147483648
        %v1935 = vxor.u32 %v1927, 2147483648
        %v1936 = vxor.u32 %v1928, 2147483648
        %v1937 = vxor.u32 %v1929, 2147483648
        %v1938 = vxor.u32 %v1930, 2147483648
        %v1939 = vmul.f32 %v1931, 1.442695
        %v1940 = vpow.pop %v1939
        %v1941 = vmul.f32 %v1932, 1.442695
        %v1942 = vpow.pop %v1941
        %v1943 = vmul.f32 %v1933, 1.442695
        %v1944 = vpow.pop %v1943
        %v1945 = vmul.f32 %v1934, 1.442695
        %v1946 = vpow.pop %v1945
        %v1947 = vmul.f32 %v1935, 1.442695
        %v1948 = vpow.pop %v1947
        %v1949 = vmul.f32 %v1936, 1.442695
        %v1950 = vpow.pop %v1949
        %v1951 = vmul.f32 %v1937, 1.442695
        %v1952 = vpow.pop %v1951
        %v1953 = vmul.f32 %v1938, 1.442695
        %v1954 = vpow.pop %v1953
        %v1955 = vadd.f32 %v1940, 1.0
        %v1956 = vadd.f32 %v1942, 1.0
        %v1957 = vadd.f32 %v1944, 1.0
        %v1958 = vadd.f32 %v1946, 1.0
        %v1959 = vadd.f32 %v1948, 1.0
        %v1960 = vadd.f32 %v1950, 1.0
        %v1961 = vadd.f32 %v1952, 1.0
        %v1962 = vadd.f32 %v1954, 1.0
        %v1963 = vrcp.pop %v1955
        %v1964 = vmul.f32 1.0, %v1963
        %v1965 = vrcp.pop %v1956
        %v1966 = vmul.f32 1.0, %v1965
        %v1967 = vrcp.pop %v1957
        %v1968 = vmul.f32 1.0, %v1967
        %v1969 = vrcp.pop %v1958
        %v1970 = vmul.f32 1.0, %v1969
        %v1971 = vrcp.pop %v1959
        %v1972 = vmul.f32 1.0, %v1971
        %v1973 = vrcp.pop %v1960
        %v1974 = vmul.f32 1.0, %v1973
        %v1975 = vrcp.pop %v1961
        %v1976 = vmul.f32 1.0, %v1975
        %v1977 = vrcp.pop %v1962
        %v1978 = vmul.f32 1.0, %v1977
        %v1979 = vadd.f32 %v1770, %v279
        %v1980 = vadd.f32 %v1775, %v284
        %v1981 = vadd.f32 %v1780, %v289
        %v1982 = vadd.f32 %v1785, %v294
        %v1983 = vmul.f32 %v1964, %v1979
        %v1984 = vmul.f32 %v1966, %v1980
        %v1985 = vmul.f32 %v1968, %v1981
        %v1986 = vmul.f32 %v1970, %v1982
        %v1987 = vadd.f32 %v1905, %v1983
        %v1988 = vadd.f32 %v1910, %v1984
        %v1989 = vadd.f32 %v1915, %v1985
        %v1990 = vadd.f32 %v1920, %v1986
        %v1991 = vtanh.pop %v1987
        %v1992 = vtanh.pop %v1988
        %v1993 = vtanh.pop %v1989
        %v1994 = vtanh.pop %v1990
        %v1995 = vsub.f32 1.0, %v1972
        %v1996 = vsub.f32 1.0, %v1974
        %v1997 = vsub.f32 1.0, %v1976
        %v1998 = vsub.f32 1.0, %v1978
        %v1999 = vmul.f32 %v1995, %v1991
        %v2000 = vmul.f32 %v1996, %v1992
        %v2001 = vmul.f32 %v1997, %v1993
        %v2002 = vmul.f32 %v1998, %v1994
        %v2003 = vmul.f32 %v1972, %v1659
        %v2004 = vmul.f32 %v1974, %v1660
        %v2005 = vmul.f32 %v1976, %v1661
        %v2006 = vmul.f32 %v1978, %v1662
        %v2007 = vadd.f32 %v1999, %v2003
        %v2008 = vadd.f32 %v2000, %v2004
        %v2009 = vadd.f32 %v2001, %v2005
        %v2010 = vadd.f32 %v2002, %v2006
        %v2011 = vsel %vm309, 1, 0
        %v2012 = vlaneseq
        %v2013 = vshrl.u32 %v2012, 7
        %v2014 = vsub.s32 0, %v2013
        %v2015 = vrot.slane %v2011, %v2014
        %vm2016 = vcmp.eq.s32.totalorder %v2015, 1
        %v2017 = vsel %vm2016, %v2007, %v1659
        %v2018 = vsel %vm2016, %v2008, %v1660
        %v2019 = vsel %vm2016, %v2009, %v1661
        %v2020 = vsel %vm2016, %v2010, %v1662
        %2021 = vmatprep.subr.mxu0 0.0
        %2022 = vmatpush1.msra.mxu0 %v2017
        %2023 = vmatprep.subr.mxu0 0.0
        %2024 = vmatpush1.msra.mxu0 %v2018
        %2025 = vmatprep.subr.mxu0 0.0
        %2026 = vmatpush1.msra.mxu0 %v2019
        %2027 = vmatprep.subr.mxu0 0.0
        %2028 = vmatpush1.msra.mxu0 %v2020
        %2029 = vmatprep.subr.mxu0 0.0
        %2030 = vmatpush1.msra.mxu0 0.0
        %2031 = vmatprep.subr.mxu0 0.0
        %2032 = vmatpush1.msra.mxu0 0.0
        %2033 = vmatprep.subr.mxu0 0.0
        %2034 = vmatpush1.msra.mxu0 0.0
        %2035 = vmatprep.subr.mxu0 0.0
        %2036 = vmatpush1.msra.mxu0 0.0
        %2037 = vmatprep.subr.mxu0 0.0
        %2038 = vmatpush1.msra.mxu0 0.0
        %2039 = vmatprep.subr.mxu0 0.0
        %2040 = vmatpush1.msra.mxu0 0.0
        %2041 = vmatprep.subr.mxu0 0.0
        %2042 = vmatpush1.msra.mxu0 0.0
        %2043 = vmatprep.subr.mxu0 0.0
        %2044 = vmatpush1.msra.mxu0 0.0
        %2045 = vmatprep.subr.mxu0 0.0
        %2046 = vmatpush1.msra.mxu0 0.0
        %2047 = vmatprep.subr.mxu0 0.0
        %2048 = vmatpush1.msra.mxu0 0.0
        %2049 = vmatprep.subr.mxu0 0.0
        %2050 = vmatpush1.msra.mxu0 0.0
        %2051 = vmatprep.subr.mxu0 0.0
        %2052 = vmatpush1.msra.mxu0 0.0
        %2053 = vmatprep.subr.mxu0 0.0
        %2054 = vmatpush1.msra.mxu0 0.0
        %2055 = vmatprep.subr.mxu0 0.0
        %2056 = vmatpush1.msra.mxu0 0.0
        %2057 = vmatprep.subr.mxu0 0.0
        %2058 = vmatpush1.msra.mxu0 0.0
        %2059 = vmatprep.subr.mxu0 0.0
        %2060 = vmatpush1.msra.mxu0 0.0
        %2061 = vmatprep.subr.mxu0 0.0
        %2062 = vmatpush1.msra.mxu0 0.0
        %2063 = vmatprep.subr.mxu0 0.0
        %2064 = vmatpush1.msra.mxu0 0.0
        %2065 = vmatprep.subr.mxu0 0.0
        %2066 = vmatpush1.msra.mxu0 0.0
        %2067 = vmatprep.subr.mxu0 0.0
        %2068 = vmatpush1.msra.mxu0 0.0
        %2069 = vmatprep.subr.mxu0 0.0
        %2070 = vmatpush1.msra.mxu0 0.0
        %2071 = vmatprep.subr.mxu0 0.0
        %2072 = vmatpush1.msra.mxu0 0.0
        %2073 = vmatprep.subr.mxu0 0.0
        %2074 = vmatpush1.msra.mxu0 0.0
        %2075 = vmatprep.subr.mxu0 0.0
        %2076 = vmatpush1.msra.mxu0 0.0
        %2077 = vmatprep.subr.mxu0 0.0
        %2078 = vmatpush1.msra.mxu0 0.0
        %2079 = vmatprep.subr.mxu0 0.0
        %2080 = vmatpush1.msra.mxu0 0.0
        %2081 = vmatprep.subr.mxu0 0.0
        %2082 = vmatpush1.msra.mxu0 0.0
        %2083 = vmatprep.subr.mxu0 0.0
        %2084 = vmatpush1.msra.mxu0 0.0
        %2085 = vmatprep.mubr.f32.mxu0 0.0
        %2086 = vmatmul.mubr.f32.gmra.mrb[0].mxu0 %v555
        %v2087 = vpop.f32.mrb[0].mxu0
        %v2088 = vadd.f32 0.0, %v2087
        %v2089 = vpop.f32.mrb[0].mxu0
        %2090 = vmatprep.mubr.f32.mxu0 0.0
        %2091 = vmatmul.mubr.f32.gmra.mrb[0].mxu0 %v558
        %v2092 = vpop.f32.mrb[0].mxu0
        %v2093 = vadd.f32 0.0, %v2092
        %v2094 = vpop.f32.mrb[0].mxu0
        %2095 = vmatprep.mubr.f32.mxu0 0.0
        %2096 = vmatmul.mubr.f32.gmra.mrb[0].mxu0 %v561
        %v2097 = vpop.f32.mrb[0].mxu0
        %v2098 = vadd.f32 0.0, %v2097
        %v2099 = vpop.f32.mrb[0].mxu0
        %2100 = vmatprep.mubr.f32.mxu0 0.0
        %2101 = vmatmul.mubr.f32.gmra.mrb[0].mxu0 %v564
        %v2102 = vpop.f32.mrb[0].mxu0
        %v2103 = vadd.f32 0.0, %v2102
        %v2104 = vpop.f32.mrb[0].mxu0
        %2105 = vmatprep.mubr.f32.mxu0 0.0
        %2106 = vmatmul.mubr.f32.gmra.mrb[0].mxu0 %v567
        %v2107 = vpop.f32.mrb[0].mxu0
        %v2108 = vadd.f32 0.0, %v2107
        %v2109 = vpop.f32.mrb[0].mxu0
        %2110 = vmatprep.mubr.f32.mxu0 0.0
        %2111 = vmatmul.mubr.f32.gmra.mrb[0].mxu0 %v570
        %v2112 = vpop.f32.mrb[0].mxu0
        %v2113 = vadd.f32 0.0, %v2112
        %v2114 = vpop.f32.mrb[0].mxu0
        %2115 = vmatprep.mubr.f32.mxu0 0.0
        %2116 = vmatmul.mubr.f32.gmra.mrb[0].mxu0 %v573
        %v2117 = vpop.f32.mrb[0].mxu0
        %v2118 = vadd.f32 0.0, %v2117
        %v2119 = vpop.f32.mrb[0].mxu0
        %2120 = vmatprep.mubr.f32.mxu0 0.0
        %2121 = vmatmul.mubr.f32.gmra.mrb[0].mxu0 %v576
        %v2122 = vpop.f32.mrb[0].mxu0
        %v2123 = vadd.f32 0.0, %v2122
        %v2124 = vpop.f32.mrb[0].mxu0
        %2125 = vmatprep.mubr.f32.mxu0 0.0
        %2126 = vmatmul.mubr.f32.gmra.mrb[0].mxu0 %v579
        %v2127 = vpop.f32.mrb[0].mxu0
        %v2128 = vadd.f32 0.0, %v2127
        %v2129 = vpop.f32.mrb[0].mxu0
        %2130 = vmatprep.mubr.f32.mxu0 0.0
        %2131 = vmatmul.mubr.f32.gmra.mrb[0].mxu0 %v582
        %v2132 = vpop.f32.mrb[0].mxu0
        %v2133 = vadd.f32 0.0, %v2132
        %v2134 = vpop.f32.mrb[0].mxu0
        %2135 = vmatprep.mubr.f32.mxu0 0.0
        %2136 = vmatmul.mubr.f32.gmra.mrb[0].mxu0 %v585
        %v2137 = vpop.f32.mrb[0].mxu0
        %v2138 = vadd.f32 0.0, %v2137
        %v2139 = vpop.f32.mrb[0].mxu0
        %2140 = vmatprep.mubr.f32.mxu0 0.0
        %2141 = vmatmul.mubr.f32.gmra.mrb[0].mxu0 %v588
        %v2142 = vpop.f32.mrb[0].mxu0
        %v2143 = vadd.f32 0.0, %v2142
        %v2144 = vpop.f32.mrb[0].mxu0
        %2145 = vdwg.mxu0
        %v2146 = vlaneseq
        %v2147 = vshrl.u32 %v2146, 7
        %v2148 = vsub.s32 5, %v2147
        %v2149 = vrot.slane %v247, %v2148
        %vm2150 = vcmp.eq.s32.totalorder %v297, %v2149
        %vm2151 = vcmp.eq.s32.totalorder %v298, %v2149
        %v2152 = vsel %vm2150, 1, 0
        %v2153 = vsel %vm2151, 1, 0
        %v2154 = vcvt.s32.f32 %v2152
        %v2155 = vcvt.s32.f32 %v2153
        %2156 = vmatprep.subr.mxu0 0.0
        %2157 = vmatpush1.msra.mxu0 %v2154
        %2158 = vmatprep.subr.mxu0 0.0
        %2159 = vmatpush1.msra.mxu0 %v2155
        %2160 = vmatprep.subr.mxu0 0.0
        %2161 = vmatpush1.msra.mxu0 0.0
        %2162 = vmatprep.subr.mxu0 0.0
        %2163 = vmatpush1.msra.mxu0 0.0
        %2164 = vmatprep.subr.mxu0 0.0
        %2165 = vmatpush1.msra.mxu0 0.0
        %2166 = vmatprep.subr.mxu0 0.0
        %2167 = vmatpush1.msra.mxu0 0.0
        %2168 = vmatprep.subr.mxu0 0.0
        %2169 = vmatpush1.msra.mxu0 0.0
        %2170 = vmatprep.subr.mxu0 0.0
        %2171 = vmatpush1.msra.mxu0 0.0
        %2172 = vmatprep.subr.mxu0 0.0
        %2173 = vmatpush1.msra.mxu0 0.0
        %2174 = vmatprep.subr.mxu0 0.0
        %2175 = vmatpush1.msra.mxu0 0.0
        %2176 = vmatprep.subr.mxu0 0.0
        %2177 = vmatpush1.msra.mxu0 0.0
        %2178 = vmatprep.subr.mxu0 0.0
        %2179 = vmatpush1.msra.mxu0 0.0
        %2180 = vmatprep.subr.mxu0 0.0
        %2181 = vmatpush1.msra.mxu0 0.0
        %2182 = vmatprep.subr.mxu0 0.0
        %2183 = vmatpush1.msra.mxu0 0.0
        %2184 = vmatprep.subr.mxu0 0.0
        %2185 = vmatpush1.msra.mxu0 0.0
        %2186 = vmatprep.subr.mxu0 0.0
        %2187 = vmatpush1.msra.mxu0 0.0
        %2188 = vmatprep.subr.mxu0 0.0
        %2189 = vmatpush1.msra.mxu0 0.0
        %2190 = vmatprep.subr.mxu0 0.0
        %2191 = vmatpush1.msra.mxu0 0.0
        %2192 = vmatprep.subr.mxu0 0.0
        %2193 = vmatpush1.msra.mxu0 0.0
        %2194 = vmatprep.subr.mxu0 0.0
        %2195 = vmatpush1.msra.mxu0 0.0
        %2196 = vmatprep.subr.mxu0 0.0
        %2197 = vmatpush1.msra.mxu0 0.0
        %2198 = vmatprep.subr.mxu0 0.0
        %2199 = vmatpush1.msra.mxu0 0.0
        %2200 = vmatprep.subr.mxu0 0.0
        %2201 = vmatpush1.msra.mxu0 0.0
        %2202 = vmatprep.subr.mxu0 0.0
        %2203 = vmatpush1.msra.mxu0 0.0
        %2204 = vmatprep.subr.mxu0 0.0
        %2205 = vmatpush1.msra.mxu0 0.0
        %2206 = vmatprep.subr.mxu0 0.0
        %2207 = vmatpush1.msra.mxu0 0.0
        %2208 = vmatprep.subr.mxu0 0.0
        %2209 = vmatpush1.msra.mxu0 0.0
        %2210 = vmatprep.subr.mxu0 0.0
        %2211 = vmatpush1.msra.mxu0 0.0
        %2212 = vmatprep.subr.mxu0 0.0
        %2213 = vmatpush1.msra.mxu0 0.0
        %2214 = vmatprep.subr.mxu0 0.0
        %2215 = vmatpush1.msra.mxu0 0.0
        %2216 = vmatprep.subr.mxu0 0.0
        %2217 = vmatpush1.msra.mxu0 0.0
        %2218 = vmatprep.subr.mxu0 0.0
        %2219 = vmatpush1.msra.mxu0 0.0
        %2220 = vmatprep.mubr.f32.mxu0 0.0
        %2221 = vmatmul.mubr.f32.gmra.mrb[0].mxu0 %v325
        %v2222 = vpop.f32.mrb[0].mxu0
        %v2223 = vadd.f32 0.0, %v2222
        %v2224 = vpop.f32.mrb[0].mxu0
        %2225 = vmatprep.mubr.f32.mxu0 0.0
        %2226 = vmatmul.mubr.f32.gmra.mrb[0].mxu0 %v328
        %v2227 = vpop.f32.mrb[0].mxu0
        %v2228 = vadd.f32 0.0, %v2227
        %v2229 = vpop.f32.mrb[0].mxu0
        %2230 = vmatprep.mubr.f32.mxu0 0.0
        %2231 = vmatmul.mubr.f32.gmra.mrb[0].mxu0 %v331
        %v2232 = vpop.f32.mrb[0].mxu0
        %v2233 = vadd.f32 0.0, %v2232
        %v2234 = vpop.f32.mrb[0].mxu0
        %2235 = vmatprep.mubr.f32.mxu0 0.0
        %2236 = vmatmul.mubr.f32.gmra.mrb[0].mxu0 %v334
        %v2237 = vpop.f32.mrb[0].mxu0
        %v2238 = vadd.f32 0.0, %v2237
        %v2239 = vpop.f32.mrb[0].mxu0
        %2240 = vmatprep.mubr.f32.mxu0 0.0
        %2241 = vmatmul.mubr.f32.gmra.mrb[0].mxu0 %v337
        %v2242 = vpop.f32.mrb[0].mxu0
        %v2243 = vadd.f32 0.0, %v2242
        %v2244 = vpop.f32.mrb[0].mxu0
        %2245 = vmatprep.mubr.f32.mxu0 0.0
        %2246 = vmatmul.mubr.f32.gmra.mrb[0].mxu0 %v340
        %v2247 = vpop.f32.mrb[0].mxu0
        %v2248 = vadd.f32 0.0, %v2247
        %v2249 = vpop.f32.mrb[0].mxu0
        %2250 = vmatprep.mubr.f32.mxu0 0.0
        %2251 = vmatmul.mubr.f32.gmra.mrb[0].mxu0 %v343
        %v2252 = vpop.f32.mrb[0].mxu0
        %v2253 = vadd.f32 0.0, %v2252
        %v2254 = vpop.f32.mrb[0].mxu0
        %2255 = vmatprep.mubr.f32.mxu0 0.0
        %2256 = vmatmul.mubr.f32.gmra.mrb[0].mxu0 %v346
        %v2257 = vpop.f32.mrb[0].mxu0
        %v2258 = vadd.f32 0.0, %v2257
        %v2259 = vpop.f32.mrb[0].mxu0
        %2260 = vmatprep.mubr.f32.mxu0 0.0
        %2261 = vmatmul.mubr.f32.gmra.mrb[0].mxu0 %v349
        %v2262 = vpop.f32.mrb[0].mxu0
        %v2263 = vadd.f32 0.0, %v2262
        %v2264 = vpop.f32.mrb[0].mxu0
        %2265 = vmatprep.mubr.f32.mxu0 0.0
        %2266 = vmatmul.mubr.f32.gmra.mrb[0].mxu0 %v352
        %v2267 = vpop.f32.mrb[0].mxu0
        %v2268 = vadd.f32 0.0, %v2267
        %v2269 = vpop.f32.mrb[0].mxu0
        %2270 = vmatprep.mubr.f32.mxu0 0.0
        %2271 = vmatmul.mubr.f32.gmra.mrb[0].mxu0 %v355
        %v2272 = vpop.f32.mrb[0].mxu0
        %v2273 = vadd.f32 0.0, %v2272
        %v2274 = vpop.f32.mrb[0].mxu0
        %2275 = vmatprep.mubr.f32.mxu0 0.0
        %2276 = vmatmul.mubr.f32.gmra.mrb[0].mxu0 %v358
        %v2277 = vpop.f32.mrb[0].mxu0
        %v2278 = vadd.f32 0.0, %v2277
        %v2279 = vpop.f32.mrb[0].mxu0
        %2280 = vdwg.mxu0
        %v2281 = vadd.f32 %v2223, %v2088
        %v2282 = vadd.f32 %v2228, %v2093
        %v2283 = vadd.f32 %v2233, %v2098
        %v2284 = vadd.f32 %v2238, %v2103
        %v2285 = vadd.f32 %v2243, %v2108
        %v2286 = vadd.f32 %v2248, %v2113
        %v2287 = vadd.f32 %v2253, %v2118
        %v2288 = vadd.f32 %v2258, %v2123
        %v2289 = vxor.u32 %v2281, 2147483648
        %v2290 = vxor.u32 %v2282, 2147483648
        %v2291 = vxor.u32 %v2283, 2147483648
        %v2292 = vxor.u32 %v2284, 2147483648
        %v2293 = vxor.u32 %v2285, 2147483648
        %v2294 = vxor.u32 %v2286, 2147483648
        %v2295 = vxor.u32 %v2287, 2147483648
        %v2296 = vxor.u32 %v2288, 2147483648
        %v2297 = vmul.f32 %v2289, 1.442695
        %v2298 = vpow.pop %v2297
        %v2299 = vmul.f32 %v2290, 1.442695
        %v2300 = vpow.pop %v2299
        %v2301 = vmul.f32 %v2291, 1.442695
        %v2302 = vpow.pop %v2301
        %v2303 = vmul.f32 %v2292, 1.442695
        %v2304 = vpow.pop %v2303
        %v2305 = vmul.f32 %v2293, 1.442695
        %v2306 = vpow.pop %v2305
        %v2307 = vmul.f32 %v2294, 1.442695
        %v2308 = vpow.pop %v2307
        %v2309 = vmul.f32 %v2295, 1.442695
        %v2310 = vpow.pop %v2309
        %v2311 = vmul.f32 %v2296, 1.442695
        %v2312 = vpow.pop %v2311
        %v2313 = vadd.f32 %v2298, 1.0
        %v2314 = vadd.f32 %v2300, 1.0
        %v2315 = vadd.f32 %v2302, 1.0
        %v2316 = vadd.f32 %v2304, 1.0
        %v2317 = vadd.f32 %v2306, 1.0
        %v2318 = vadd.f32 %v2308, 1.0
        %v2319 = vadd.f32 %v2310, 1.0
        %v2320 = vadd.f32 %v2312, 1.0
        %v2321 = vrcp.pop %v2313
        %v2322 = vmul.f32 1.0, %v2321
        %v2323 = vrcp.pop %v2314
        %v2324 = vmul.f32 1.0, %v2323
        %v2325 = vrcp.pop %v2315
        %v2326 = vmul.f32 1.0, %v2325
        %v2327 = vrcp.pop %v2316
        %v2328 = vmul.f32 1.0, %v2327
        %v2329 = vrcp.pop %v2317
        %v2330 = vmul.f32 1.0, %v2329
        %v2331 = vrcp.pop %v2318
        %v2332 = vmul.f32 1.0, %v2331
        %v2333 = vrcp.pop %v2319
        %v2334 = vmul.f32 1.0, %v2333
        %v2335 = vrcp.pop %v2320
        %v2336 = vmul.f32 1.0, %v2335
        %v2337 = vadd.f32 %v2128, %v279
        %v2338 = vadd.f32 %v2133, %v284
        %v2339 = vadd.f32 %v2138, %v289
        %v2340 = vadd.f32 %v2143, %v294
        %v2341 = vmul.f32 %v2322, %v2337
        %v2342 = vmul.f32 %v2324, %v2338
        %v2343 = vmul.f32 %v2326, %v2339
        %v2344 = vmul.f32 %v2328, %v2340
        %v2345 = vadd.f32 %v2263, %v2341
        %v2346 = vadd.f32 %v2268, %v2342
        %v2347 = vadd.f32 %v2273, %v2343
        %v2348 = vadd.f32 %v2278, %v2344
        %v2349 = vtanh.pop %v2345
        %v2350 = vtanh.pop %v2346
        %v2351 = vtanh.pop %v2347
        %v2352 = vtanh.pop %v2348
        %v2353 = vsub.f32 1.0, %v2330
        %v2354 = vsub.f32 1.0, %v2332
        %v2355 = vsub.f32 1.0, %v2334
        %v2356 = vsub.f32 1.0, %v2336
        %v2357 = vmul.f32 %v2353, %v2349
        %v2358 = vmul.f32 %v2354, %v2350
        %v2359 = vmul.f32 %v2355, %v2351
        %v2360 = vmul.f32 %v2356, %v2352
        %v2361 = vmul.f32 %v2330, %v2017
        %v2362 = vmul.f32 %v2332, %v2018
        %v2363 = vmul.f32 %v2334, %v2019
        %v2364 = vmul.f32 %v2336, %v2020
        %v2365 = vadd.f32 %v2357, %v2361
        %v2366 = vadd.f32 %v2358, %v2362
        %v2367 = vadd.f32 %v2359, %v2363
        %v2368 = vadd.f32 %v2360, %v2364
        %v2369 = vsel %vm312, 1, 0
        %v2370 = vlaneseq
        %v2371 = vshrl.u32 %v2370, 7
        %v2372 = vsub.s32 0, %v2371
        %v2373 = vrot.slane %v2369, %v2372
        %vm2374 = vcmp.eq.s32.totalorder %v2373, 1
        %v2375 = vsel %vm2374, %v2365, %v2017
        %v2376 = vsel %vm2374, %v2366, %v2018
        %v2377 = vsel %vm2374, %v2367, %v2019
        %v2378 = vsel %vm2374, %v2368, %v2020
        %v2379 = vld [vmem:[%s4] sm:$0xf]
        %v2380 = vld [vmem:[%s5] sm:$0xf]
        %2382 = vset.pattern.permute.xlu0 0
        %2383 = vperm.xlu0 %2382, %v2380
        %v2384 = vpop.permute.xlu0 %2383
        %v2387 = vsel %vm553, %v2379, 0
        %2389 = vmatprep.subr.mxu0 0.0
        %2390 = vmatpush1.msra.mxu0 %v2375
        %2391 = vmatprep.subr.mxu0 0.0
        %2392 = vmatpush1.msra.mxu0 %v2376
        %2393 = vmatprep.subr.mxu0 0.0
        %2394 = vmatpush1.msra.mxu0 %v2377
        %2395 = vmatprep.subr.mxu0 0.0
        %2396 = vmatpush1.msra.mxu0 %v2378
        %2397 = vmatprep.subr.mxu0 0.0
        %2398 = vmatpush1.msra.mxu0 0.0
        %2399 = vmatprep.subr.mxu0 0.0
        %2400 = vmatpush1.msra.mxu0 0.0
        %2401 = vmatprep.subr.mxu0 0.0
        %2402 = vmatpush1.msra.mxu0 0.0
        %2403 = vmatprep.subr.mxu0 0.0
        %2404 = vmatpush1.msra.mxu0 0.0
        %2405 = vmatprep.subr.mxu0 0.0
        %2406 = vmatpush1.msra.mxu0 0.0
        %2407 = vmatprep.subr.mxu0 0.0
        %2408 = vmatpush1.msra.mxu0 0.0
        %2409 = vmatprep.subr.mxu0 0.0
        %2410 = vmatpush1.msra.mxu0 0.0
        %2411 = vmatprep.subr.mxu0 0.0
        %2412 = vmatpush1.msra.mxu0 0.0
        %2413 = vmatprep.subr.mxu0 0.0
        %2414 = vmatpush1.msra.mxu0 0.0
        %2415 = vmatprep.subr.mxu0 0.0
        %2416 = vmatpush1.msra.mxu0 0.0
        %2417 = vmatprep.subr.mxu0 0.0
        %2418 = vmatpush1.msra.mxu0 0.0
        %2419 = vmatprep.subr.mxu0 0.0
        %2420 = vmatpush1.msra.mxu0 0.0
        %2421 = vmatprep.subr.mxu0 0.0
        %2422 = vmatpush1.msra.mxu0 0.0
        %2423 = vmatprep.subr.mxu0 0.0
        %2424 = vmatpush1.msra.mxu0 0.0
        %2425 = vmatprep.subr.mxu0 0.0
        %2426 = vmatpush1.msra.mxu0 0.0
        %2427 = vmatprep.subr.mxu0 0.0
        %2428 = vmatpush1.msra.mxu0 0.0
        %2429 = vmatprep.subr.mxu0 0.0
        %2430 = vmatpush1.msra.mxu0 0.0
        %2431 = vmatprep.subr.mxu0 0.0
        %2432 = vmatpush1.msra.mxu0 0.0
        %2433 = vmatprep.subr.mxu0 0.0
        %2434 = vmatpush1.msra.mxu0 0.0
        %2435 = vmatprep.subr.mxu0 0.0
        %2436 = vmatpush1.msra.mxu0 0.0
        %2437 = vmatprep.subr.mxu0 0.0
        %2438 = vmatpush1.msra.mxu0 0.0
        %2439 = vmatprep.subr.mxu0 0.0
        %2440 = vmatpush1.msra.mxu0 0.0
        %2441 = vmatprep.subr.mxu0 0.0
        %2442 = vmatpush1.msra.mxu0 0.0
        %2443 = vmatprep.subr.mxu0 0.0
        %2444 = vmatpush1.msra.mxu0 0.0
        %2445 = vmatprep.subr.mxu0 0.0
        %2446 = vmatpush1.msra.mxu0 0.0
        %2447 = vmatprep.subr.mxu0 0.0
        %2448 = vmatpush1.msra.mxu0 0.0
        %2449 = vmatprep.subr.mxu0 0.0
        %2450 = vmatpush1.msra.mxu0 0.0
        %2451 = vmatprep.subr.mxu0 0.0
        %2452 = vmatpush1.msra.mxu0 0.0
        %2453 = vmatprep.mubr.f32.mxu0 0.0
        %2454 = vmatmul.mubr.f32.gmra.mrb[0].mxu0 %v2387
        %v2455 = vpop.f32.mrb[0].mxu0
        %v2456 = vadd.f32 %v2384, %v2455
        %v2457 = vpop.f32.mrb[0].mxu0
        %2458 = vdwg.mxu0
        %2459 = vst [vmem:[%s242] sm:$0xf] %v2456
        %s2460 = sand.u32 %s159, 1
        %s2461 = scalar_lea.sflag [#allocation3], %s2460
        %s2462 = sand.u32 %s159, 1
        %s2463 = smul.addr %s2462, 4
        %s2464 = scalar_lea.vmem [#allocation2], %s2463
        // Predicated region
        $region45: #{tpu_custom_call.1} parent=43 // pred_check
          %p2465 = pneg %p169
        $region46: #{tpu_custom_call.1} parent=43 // pred_check_branch
          %2467 = sbr.rel (%p2465) target = $region48
        $region47: #{tpu_custom_call.1} parent=43 // pred_region
          %s2469 = ssub.s32 64, 64
          %2470 = vsyncadd %s2461, %s2469
          %s2471 = smul.addr %s20, 64
          %s2472 = scalar_lea.hbm %s6, %s2471
          %s2474 = sshll.u32 %s2464, 4
          %s2475 = int_to_ptr.vmem [resolvable:$true] %s2474
          %2477 = dma.vmem_to_hbm [thread:$0]  %s2475, 64, %s2472, %s2461
        $region48: #{tpu_custom_call.1} parent=43 // pred_fallthru
          _
      $region44: #{tpu_custom_call.1} parent=5 // pred_fallthru
        _
      %p2478 = scmp.le.s32.totalorder 2, %s15
      // Predicated region
      $region49: #{tpu_custom_call.1} parent=5 // pred_check
        %p2479 = pneg %p2478
      $region50: #{tpu_custom_call.1} parent=5 // pred_check_branch
        %2481 = sbr.rel (%p2479) target = $region52
      $region51: #{tpu_custom_call.1} parent=5 // pred_region
        %s2482 = ssub.s32 %s15, 2
        // Predicated region
        $region53: #{tpu_custom_call.1} parent=51 // pred_check
          %p2483 = pneg %p175
        $region54: #{tpu_custom_call.1} parent=51 // pred_check_branch
          %2485 = sbr.rel (%p2483) target = $region56
        $region55: #{tpu_custom_call.1} parent=51 // pred_region
          %s2486 = sand.u32 %s160, 1
          %s2487 = scalar_lea.sflag [#allocation3], %s2486
          %s2488 = sand.u32 %s160, 1
          %s2489 = smul.addr %s2488, 4
          %s2490 = scalar_lea.vmem [#allocation2], %s2489
          %2491 = dma.done %s2487, 64
        $region56: #{tpu_custom_call.1} parent=51 // pred_fallthru
          _
      $region52: #{tpu_custom_call.1} parent=5 // pred_fallthru
        _
    $region6: #{tpu_custom_call.1} parent=1 // loop_footer
      %s19 = sadd.s32 1, %s15
    $region7: #{tpu_custom_call.1} parent=1 // loop_footer_branch
      %14 = sbr.rel target = $region3
    $region8: #{tpu_custom_call.1} parent=1 // loop_exit
      _
    %2492 = vsyncpa [#allocation3], 1
    %s2493 = scalar_lea.sflag [#allocation3], 1
    %2494 = vsyncpa %s2493, 1

</llo_original>
